<compile_context>
chip_gen: v7x
topology: tpu7x:2x2x1
jax: 0.10.0
libtpu: 0.0.40
codegen_flags: <defaults>
</compile_context>

<pallas_src>
import functools
import math

import jax
import jax.numpy as jnp
from jax import lax
from jax.experimental import pallas as pl
from jax.experimental.pallas import tpu as pltpu


WEIGHT_KEYS = ("wqkv", "bqkv", "wo", "bo", "g1", "b1", "g2", "b2",
               "w1", "bf1", "w2", "bf2")


# --------------------------------------------------------------------------
# In-kernel math helpers (traced inside the Pallas kernel body)
# --------------------------------------------------------------------------
def _layer_norm(x, g, b, eps=1e-12):
    # BertLayerNorm: biased variance over last dim, eps=1e-12 (f32 math)
    mu = jnp.mean(x, axis=-1, keepdims=True)
    var = jnp.mean((x - mu) ** 2, axis=-1, keepdims=True)
    return (x - mu) * lax.rsqrt(var + eps) * g + b


def _gelu(x):
    # tanh-approximation GELU (as in the DeepSpeed transformer kernel)
    c = 0.7978845608028654  # sqrt(2/pi)
    return 0.5 * x * (1.0 + jnp.tanh(c * (x + 0.044715 * x * x * x)))


# --------------------------------------------------------------------------
# Whole encoder stack: one kernel body per (batch element, layer) grid step
# --------------------------------------------------------------------------
def encoder_stack_kernel(num_heads, pre_layer_norm, fuse_final_ln, num_layers,
                         x_ref, mask_ref,
                         wqkv_ref, bqkv_ref, wo_ref, bo_ref,
                         g1_ref, b1_ref, g2_ref, b2_ref,
                         w1_ref, bf1_ref, w2_ref, bf2_ref,
                         gf_ref, bf_ref,
                         out_ref,
                         res_ref, ctx_ref):
    f32, bf16 = jnp.float32, jnp.bfloat16
    l = pl.program_id(1)

    # First layer of each batch element: load the input into the VMEM carry.
    @pl.when(l == 0)
    def _():
        res_ref[...] = x_ref[...].astype(f32)

    x = res_ref[...]                                 # (S, H) f32 residual stream
    S, H = x.shape
    hd = H // num_heads
    scale = 1.0 / math.sqrt(hd)

    g1, b1 = g1_ref[...], b1_ref[...]
    g2, b2 = g2_ref[...], b2_ref[...]
    mask_row = mask_ref[...].astype(f32)             # (1, S) additive mask row

    # ---- attention ----
    attn_in = _layer_norm(x, g1, b1) if pre_layer_norm else x

    # fused QKV projection: bf16 operands, f32 accumulation on the MXU
    qkv = jnp.dot(attn_in.astype(bf16), wqkv_ref[...],
                  preferred_element_type=f32) + bqkv_ref[...].astype(f32)  # (S, 3H)

    # fold 1/sqrt(hd) into q once (not into scores per head)
    q = (qkv[:, 0:H] * scale).astype(bf16)
    k = qkv[:, H:2 * H].astype(bf16)
    v = qkv[:, 2 * H:3 * H].astype(bf16)

    # Per-head scores/softmax/context.  Per-head context is written into a
    # lane-contiguous (S, H) VMEM scratch so the output projection below runs
    # as a single K=H MXU matmul.  Static lane slices: head offsets are
    # compile-time constants (dynamic lane starts at head_dim<128 would force
    # relayouts).
    dn = (((1,), (1,)), ((), ()))   # contract dim 1 of q_h with dim 1 of k_h (no .T)
    for h in range(num_heads):
        lo, hi = h * hd, (h + 1) * hd
        s = lax.dot_general(q[:, lo:hi], k[:, lo:hi], dn,
                            preferred_element_type=f32)          # (S, S)
        s = s + mask_row                                          # (1,S) row broadcast
        s = s - jnp.max(s, axis=-1, keepdims=True)
        p = jnp.exp(s)
        # EUP reciprocal; normalize AFTER the PV matmul (on (S,hd), not (S,S))
        inv = pl.reciprocal(jnp.sum(p, axis=-1, keepdims=True), approx=True)
        ctx = jnp.dot(p.astype(bf16), v[:, lo:hi], preferred_element_type=f32)
        ctx_ref[:, lo:hi] = (ctx * inv).astype(bf16)

    # single fused output projection, K=H
    attn_out = jnp.dot(ctx_ref[...], wo_ref[...],
                       preferred_element_type=f32) + bo_ref[...].astype(f32)

    if pre_layer_norm:
        x2 = x + attn_out
        ffn_in = _layer_norm(x2, g2, b2)
    else:
        x2 = _layer_norm(x + attn_out, g1, b1)
        ffn_in = x2

    # ---- feed-forward (bf16 MXU, f32 accumulation, f32 GELU) ----
    h1 = _gelu(jnp.dot(ffn_in.astype(bf16), w1_ref[...],
                       preferred_element_type=f32) + bf1_ref[...].astype(f32))
    ff = jnp.dot(h1.astype(bf16), w2_ref[...],
                 preferred_element_type=f32) + bf2_ref[...].astype(f32)

    new_x = x2 + ff if pre_layer_norm else _layer_norm(x2 + ff, g2, b2)

    # carry residual stream to next layer step (stays in VMEM, no HBM roundtrip)
    res_ref[...] = new_x
    out_ref[...] = new_x.astype(out_ref.dtype)

    if fuse_final_ln:
        # output_all_encoded_layers=False & pre_layer_norm: apply FinalLayerNorm
        # in-place at the last layer step (out block is resident across l).
        @pl.when(l == num_layers - 1)
        def _():
            out_ref[...] = _layer_norm(new_x, gf_ref[...],
                                       bf_ref[...]).astype(out_ref.dtype)


def _vmem_limit_bytes(S, H, I):
    """Scoped-VMEM budget from the per-grid-step footprint, capped by physical VMEM."""
    w_layer = (H * 3 * H + 3 * H + H * H + H + H * I + I + I * H + H) * 2   # bf16 weights
    ln_layer = 4 * H * 4                                                    # f32 LN params
    blocks = (S * H + S + S * H) * 4                       # x block, mask, out block (f32)
    scratch = S * H * 4 + S * H * 2                        # residual carry + ctx slab
    transients = (S * 3 * H + S * I + 2 * S * S) * 4       # qkv, h1, scores/probs
    # weights double-buffered (that's the cross-layer prefetch); +8 MiB headroom
    need = 2 * (w_layer + ln_layer) + 2 * blocks + scratch + transients + (8 << 20)
    try:
        phys = getattr(pltpu.get_tpu_info(), "vmem_capacity_bytes", None) or (128 << 20)
    except Exception:
        phys = 64 << 20                                    # conservative (v7x per-TC)
    cap = int(phys * 0.85)
    return int(max(min(need, cap), min(32 << 20, cap)))


def encoder_stack(x, add_mask, stacked, final_g, final_b,
                  num_heads, pre_layer_norm, output_all):
    """x: (B,S,H) f32; add_mask: (B,1,S) additive mask; stacked: dict of (L,...) weights."""
    B, S, H = x.shape
    L = stacked["wqkv"].shape[0]
    I = stacked["w1"].shape[-1]
    fuse_final_ln = (not output_all) and pre_layer_norm

    kernel = functools.partial(encoder_stack_kernel, num_heads, pre_layer_norm,
                               fuse_final_ln, L)

    def wspec(a):
        nd = a.ndim   # stacked (L, ...) weight: block changes with l -> prefetched
        return pl.BlockSpec((None,) + a.shape[1:],
                            lambda b, l, _nd=nd: (l,) + (0,) * (_nd - 1))

    weights = [stacked[kname] for kname in WEIGHT_KEYS]

    in_specs = ([pl.BlockSpec((None, S, H), lambda b, l: (b, 0, 0)),   # x (used at l==0)
                 pl.BlockSpec((None, 1, S), lambda b, l: (b, 0, 0))]   # additive mask row
                + [wspec(w) for w in weights]
                + [pl.BlockSpec((1, H), lambda b, l: (0, 0)),          # final LN gamma
                   pl.BlockSpec((1, H), lambda b, l: (0, 0))])         # final LN beta

    if output_all:
        out_shape = jax.ShapeDtypeStruct((B, L, S, H), x.dtype)
        out_spec = pl.BlockSpec((None, None, S, H), lambda b, l: (b, l, 0, 0))
    else:
        # constant block index across l -> output stays resident, written back once
        out_shape = jax.ShapeDtypeStruct((B, S, H), x.dtype)
        out_spec = pl.BlockSpec((None, S, H), lambda b, l: (b, 0, 0))

    return pl.pallas_call(
        kernel,
        out_shape=out_shape,
        grid=(B, L),
        in_specs=in_specs,
        out_specs=out_spec,
        scratch_shapes=[pltpu.VMEM((S, H), jnp.float32),    # residual carry across layers
                        pltpu.VMEM((S, H), jnp.bfloat16)],  # per-head context slab
        compiler_params=pltpu.CompilerParams(
            dimension_semantics=("parallel", "arbitrary"),
            vmem_limit_bytes=_vmem_limit_bytes(S, H, I)),
    )(x, add_mask, *weights, final_g, final_b)


# --------------------------------------------------------------------------
# DSEncoder wrapper (glue in plain JAX, hot path in Pallas)
# --------------------------------------------------------------------------
class DSEncoderPallas:
    def __init__(self, stacked_params, final_g, final_b, num_heads, pre_layer_norm):
        self.stacked = stacked_params
        self.final_g = final_g
        self.final_b = final_b
        self.num_heads = num_heads
        self.pre_layer_norm = pre_layer_norm
        self.num_layers = stacked_params["wqkv"].shape[0]

    def __call__(self, hidden_states, attention_mask,
                 output_all_encoded_layers=True, checkpoint_activations=False):
        if checkpoint_activations:
            # matches reference behaviour
            raise NotImplementedError("`checkpoint` below is not defined")
        B, S, _ = hidden_states.shape
        add_mask = attention_mask.reshape(B, 1, S).astype(jnp.float32)

        if output_all_encoded_layers:
            outs = encoder_stack(hidden_states, add_mask, self.stacked,
                                 self.final_g, self.final_b,
                                 self.num_heads, self.pre_layer_norm,
                                 output_all=True)               # (B, L, S, H)
            return [outs[:, i] for i in range(self.num_layers)]
        else:
            out = encoder_stack(hidden_states, add_mask, self.stacked,
                                self.final_g, self.final_b,
                                self.num_heads, self.pre_layer_norm,
                                output_all=False)                # (B, S, H), LN fused
            return [out]


# --------------------------------------------------------------------------
# Deterministic synthetic parameter init (matmul weights/biases in bf16,
# LayerNorm params in f32), stacked along a leading layer axis.
# --------------------------------------------------------------------------
def init_params(key, num_layers, H, I):
    bf16 = jnp.bfloat16
    L = num_layers

    def nrm(k, shape, s=0.02):
        return s * jax.random.normal(k, shape, jnp.float32)

    key, *ks = jax.random.split(key, 11)
    stacked = dict(
        wqkv=nrm(ks[0], (L, H, 3 * H)).astype(bf16),
        bqkv=nrm(ks[1], (L, 1, 3 * H)).astype(bf16),
        wo=nrm(ks[2], (L, H, H)).astype(bf16),
        bo=nrm(ks[3], (L, 1, H)).astype(bf16),
        g1=1.0 + 0.1 * jax.random.normal(ks[4], (L, 1, H), jnp.float32),
        b1=0.1 * jax.random.normal(ks[5], (L, 1, H), jnp.float32),
        g2=1.0 + 0.1 * jax.random.normal(ks[6], (L, 1, H), jnp.float32),
        b2=0.1 * jax.random.normal(ks[7], (L, 1, H), jnp.float32),
        w1=nrm(ks[8], (L, H, I)).astype(bf16),
        bf1=jnp.zeros((L, 1, I), bf16),
        w2=nrm(ks[9], (L, I, H)).astype(bf16),
        bf2=jnp.zeros((L, 1, H), bf16),
    )
    key, kg, kb = jax.random.split(key, 3)
    final_g = 1.0 + 0.1 * jax.random.normal(kg, (1, H), jnp.float32)
    final_b = 0.1 * jax.random.normal(kb, (1, H), jnp.float32)
    return stacked, final_g, final_b


# --------------------------------------------------------------------------
# Pure-JAX reference (f32 math, using the same bf16-rounded weights)
# --------------------------------------------------------------------------
def _ref_ln(x, g, b, eps=1e-12):
    mu = x.mean(-1, keepdims=True)
    var = ((x - mu) ** 2).mean(-1, keepdims=True)
    return (x - mu) / jnp.sqrt(var + eps) * g.reshape(-1) + b.reshape(-1)


def _ref_gelu(x):
    c = 0.7978845608028654
    return 0.5 * x * (1.0 + jnp.tanh(c * (x + 0.044715 * x ** 3)))


def ref_layer(x, mask4, p, nh, pre_ln):
    f = lambda a: a.astype(jnp.float32)
    B, S, H = x.shape
    hd = H // nh
    hp = jax.lax.Precision.HIGHEST
    attn_in = _ref_ln(x, p["g1"], p["b1"]) if pre_ln else x
    qkv = jnp.einsum('bsh,hk->bsk', attn_in, f(p["wqkv"]), precision=hp) + f(p["bqkv"]).reshape(-1)
    q, k, v = jnp.split(qkv, 3, axis=-1)
    q = q.reshape(B, S, nh, hd).transpose(0, 2, 1, 3)
    k = k.reshape(B, S, nh, hd).transpose(0, 2, 1, 3)
    v = v.reshape(B, S, nh, hd).transpose(0, 2, 1, 3)
    scores = jnp.einsum('bnqd,bnkd->bnqk', q, k, precision=hp) / (hd ** 0.5) + mask4
    probs = jax.nn.softmax(scores, axis=-1)
    ctx = jnp.einsum('bnqk,bnkd->bnqd', probs, v, precision=hp)
    ctx = ctx.transpose(0, 2, 1, 3).reshape(B, S, H)
    attn_out = jnp.einsum('bsh,hk->bsk', ctx, f(p["wo"]), precision=hp) + f(p["bo"]).reshape(-1)
    if pre_ln:
        x2 = x + attn_out
        ffn_in = _ref_ln(x2, p["g2"], p["b2"])
    else:
        x2 = _ref_ln(x + attn_out, p["g1"], p["b1"])
        ffn_in = x2
    h1 = _ref_gelu(jnp.einsum('bsh,hi->bsi', ffn_in, f(p["w1"]), precision=hp) + f(p["bf1"]).reshape(-1))
    ff = jnp.einsum('bsi,ih->bsh', h1, f(p["w2"]), precision=hp) + f(p["bf2"]).reshape(-1)
    return x2 + ff if pre_ln else _ref_ln(x2 + ff, p["g2"], p["b2"])


# --------------------------------------------------------------------------
if __name__ == "__main__":
    B, S, H = 2, 8, 32          # batch, seq, hidden
    NH, I, L = 4, 128, 2        # heads, intermediate, num_hidden_layers
    PRE_LN = True

    key = jax.random.PRNGKey(0)
    key, kx = jax.random.split(key)
    hidden_states = jax.random.normal(kx, (B, S, H), jnp.float32)

    # BERT-style input mask -> extended additive mask of shape (B, 1, 1, S)
    input_mask = jnp.array([[1] * S, [1] * (S - 2) + [0, 0]], dtype=jnp.float32)
    attention_mask = ((1.0 - input_mask) * -10000.0).reshape(B, 1, 1, S)

    stacked_params, final_g, final_b = init_params(key, L, H, I)
    encoder = DSEncoderPallas(stacked_params, final_g, final_b, NH, PRE_LN)

    # Path 1: output_all_encoded_layers=True (module default)
    all_layers = encoder(hidden_states, attention_mask, output_all_encoded_layers=True)
    # Path 2: output_all_encoded_layers=False (exercises fused FinalLayerNorm)
    final_only = encoder(hidden_states, attention_mask, output_all_encoded_layers=False)

    jax.block_until_ready(all_layers)
    jax.block_until_ready(final_only)

    # numerical sanity check against a pure-JAX f32 reference
    # (tolerance covers bf16 MXU operands + approx softmax reciprocal)
    ref = hidden_states
    for i in range(L):
        p_i = {kname: stacked_params[kname][i] for kname in WEIGHT_KEYS}
        ref = ref_layer(ref, attention_mask, p_i, NH, PRE_LN)
    ref_final = _ref_ln(ref, final_g, final_b) if PRE_LN else ref

    assert len(all_layers) == L and len(final_only) == 1
    assert all_layers[-1].shape == (B, S, H) and final_only[0].shape == (B, S, H)
    assert jnp.all(jnp.isfinite(all_layers[-1])) and jnp.all(jnp.isfinite(final_only[0]))
    assert jnp.allclose(all_layers[-1], ref, rtol=2e-2, atol=2e-2)
    assert jnp.allclose(final_only[0], ref_final, rtol=2e-2, atol=2e-2)

    print("KERNEL_OK")
</pallas_src>

<mosaic_0001>
module attributes {stable_mosaic.version = 11 : i64} {
  func.func @encoder_stack_kernel(%arg0: i32, %arg1: i32, %arg2: memref<1x8x32xf32, #tpu.memory_space<vmem>>, %arg3: memref<1x1x8xf32, #tpu.memory_space<vmem>>, %arg4: memref<1x32x96xbf16, #tpu.memory_space<vmem>>, %arg5: memref<1x1x96xbf16, #tpu.memory_space<vmem>>, %arg6: memref<1x32x32xbf16, #tpu.memory_space<vmem>>, %arg7: memref<1x1x32xbf16, #tpu.memory_space<vmem>>, %arg8: memref<1x1x32xf32, #tpu.memory_space<vmem>>, %arg9: memref<1x1x32xf32, #tpu.memory_space<vmem>>, %arg10: memref<1x1x32xf32, #tpu.memory_space<vmem>>, %arg11: memref<1x1x32xf32, #tpu.memory_space<vmem>>, %arg12: memref<1x32x128xbf16, #tpu.memory_space<vmem>>, %arg13: memref<1x1x128xbf16, #tpu.memory_space<vmem>>, %arg14: memref<1x128x32xbf16, #tpu.memory_space<vmem>>, %arg15: memref<1x1x32xbf16, #tpu.memory_space<vmem>>, %arg16: memref<1x32xf32, #tpu.memory_space<vmem>>, %arg17: memref<1x32xf32, #tpu.memory_space<vmem>>, %arg18: memref<1x1x8x32xf32, #tpu.memory_space<vmem>>, %arg19: memref<8x32xf32, #tpu.memory_space<vmem>>, %arg20: memref<8x32xbf16, #tpu.memory_space<vmem>>) attributes {dimension_semantics = [#tpu.dimension_semantics<parallel>, #tpu.dimension_semantics<arbitrary>], iteration_bounds = array<i64: 2, 2>, scalar_prefetch = 0 : i64, scratch_operands = 2 : i64, tpu.core_type = #tpu.core_type<tc>, window_params = [{transform_indices = @transform_0, window_bounds = array<i64: 1, 8, 32>}, {transform_indices = @transform_1, window_bounds = array<i64: 1, 1, 8>}, {transform_indices = @transform_2, window_bounds = array<i64: 1, 32, 96>}, {transform_indices = @transform_3, window_bounds = array<i64: 1, 1, 96>}, {transform_indices = @transform_4, window_bounds = array<i64: 1, 32, 32>}, {transform_indices = @transform_5, window_bounds = array<i64: 1, 1, 32>}, {transform_indices = @transform_6, window_bounds = array<i64: 1, 1, 32>}, {transform_indices = @transform_7, window_bounds = array<i64: 1, 1, 32>}, {transform_indices = @transform_8, window_bounds = array<i64: 1, 1, 32>}, {transform_indices = @transform_9, window_bounds = array<i64: 1, 1, 32>}, {transform_indices = @transform_10, window_bounds = array<i64: 1, 32, 128>}, {transform_indices = @transform_11, window_bounds = array<i64: 1, 1, 128>}, {transform_indices = @transform_12, window_bounds = array<i64: 1, 128, 32>}, {transform_indices = @transform_13, window_bounds = array<i64: 1, 1, 32>}, {pipeline_mode = #tpu.pipeline_mode<synchronous>, transform_indices = @transform_14, window_bounds = array<i64: 1, 32>}, {pipeline_mode = #tpu.pipeline_mode<synchronous>, transform_indices = @transform_15, window_bounds = array<i64: 1, 32>}, {transform_indices = @transform_16, window_bounds = array<i64: 1, 1, 8, 32>}]} {
    %c0_i32 = arith.constant 0 : i32
    %0 = arith.cmpi eq, %arg1, %c0_i32 : i32
    %1 = arith.extui %0 : i1 to i32
    %c0_i32_0 = arith.constant 0 : i32
    %2 = arith.cmpi ne, %1, %c0_i32_0 : i32
    scf.if %2 {
      %c0_88 = arith.constant 0 : index
      %c0_89 = arith.constant 0 : index
      %c0_90 = arith.constant 0 : index
      %201 = vector.load %arg2[%c0_88, %c0_89, %c0_90] : memref<1x8x32xf32, #tpu.memory_space<vmem>>, vector<1x8x32xf32>
      %202 = vector.shape_cast %201 : vector<1x8x32xf32> to vector<8x32xf32>
      %c0_91 = arith.constant 0 : index
      %c0_92 = arith.constant 0 : index
      %203 = vector.load %arg19[%c0_91, %c0_92] : memref<8x32xf32, #tpu.memory_space<vmem>>, vector<8x32xf32>
      tpu.vector_store %arg19[%c0_91, %c0_92], %202 {strides = array<i32>} : memref<8x32xf32, #tpu.memory_space<vmem>>, vector<8x32xf32>,
    } else {
    }
    %c0 = arith.constant 0 : index
    %c0_1 = arith.constant 0 : index
    %3 = vector.load %arg19[%c0, %c0_1] : memref<8x32xf32, #tpu.memory_space<vmem>>, vector<8x32xf32>
    %c0_2 = arith.constant 0 : index
    %c0_3 = arith.constant 0 : index
    %c0_4 = arith.constant 0 : index
    %4 = vector.load %arg8[%c0_2, %c0_3, %c0_4] : memref<1x1x32xf32, #tpu.memory_space<vmem>>, vector<1x1x32xf32>
    %5 = vector.shape_cast %4 : vector<1x1x32xf32> to vector<1x32xf32>
    %c0_5 = arith.constant 0 : index
    %c0_6 = arith.constant 0 : index
    %c0_7 = arith.constant 0 : index
    %6 = vector.load %arg9[%c0_5, %c0_6, %c0_7] : memref<1x1x32xf32, #tpu.memory_space<vmem>>, vector<1x1x32xf32>
    %7 = vector.shape_cast %6 : vector<1x1x32xf32> to vector<1x32xf32>
    %c0_8 = arith.constant 0 : index
    %c0_9 = arith.constant 0 : index
    %c0_10 = arith.constant 0 : index
    %8 = vector.load %arg10[%c0_8, %c0_9, %c0_10] : memref<1x1x32xf32, #tpu.memory_space<vmem>>, vector<1x1x32xf32>
    %9 = vector.shape_cast %8 : vector<1x1x32xf32> to vector<1x32xf32>
    %c0_11 = arith.constant 0 : index
    %c0_12 = arith.constant 0 : index
    %c0_13 = arith.constant 0 : index
    %10 = vector.load %arg11[%c0_11, %c0_12, %c0_13] : memref<1x1x32xf32, #tpu.memory_space<vmem>>, vector<1x1x32xf32>
    %11 = vector.shape_cast %10 : vector<1x1x32xf32> to vector<1x32xf32>
    %c0_14 = arith.constant 0 : index
    %c0_15 = arith.constant 0 : index
    %c0_16 = arith.constant 0 : index
    %12 = vector.load %arg3[%c0_14, %c0_15, %c0_16] : memref<1x1x8xf32, #tpu.memory_space<vmem>>, vector<1x1x8xf32>
    %13 = vector.shape_cast %12 : vector<1x1x8xf32> to vector<1x8xf32>
    %cst = arith.constant dense<0.000000e+00> : vector<8xf32>
    %14 = vector.multi_reduction <add>, %3, %cst [1] : vector<8x32xf32> to vector<8xf32>
    %15 = vector.shape_cast %14 : vector<8xf32> to vector<8x1xf32>
    %cst_17 = arith.constant 3.200000e+01 : f32
    %16 = vector.broadcast %cst_17 : f32 to vector<8x1xf32>
    %17 = arith.divf %15, %16 : vector<8x1xf32>
    %18 = vector.broadcast %17 : vector<8x1xf32> to vector<8x32xf32>
    %19 = arith.subf %3, %18 : vector<8x32xf32>
    %20 = arith.mulf %19, %19 : vector<8x32xf32>
    %cst_18 = arith.constant dense<0.000000e+00> : vector<8xf32>
    %21 = vector.multi_reduction <add>, %20, %cst_18 [1] : vector<8x32xf32> to vector<8xf32>
    %22 = vector.shape_cast %21 : vector<8xf32> to vector<8x1xf32>
    %cst_19 = arith.constant 3.200000e+01 : f32
    %23 = vector.broadcast %cst_19 : f32 to vector<8x1xf32>
    %24 = arith.divf %22, %23 : vector<8x1xf32>
    %25 = vector.broadcast %17 : vector<8x1xf32> to vector<8x32xf32>
    %26 = arith.subf %3, %25 : vector<8x32xf32>
    %cst_20 = arith.constant 9.99999996E-13 : f32
    %27 = vector.broadcast %cst_20 : f32 to vector<8x1xf32>
    %28 = arith.addf %24, %27 : vector<8x1xf32>
    %29 = math.rsqrt %28 : vector<8x1xf32>
    %30 = vector.broadcast %29 : vector<8x1xf32> to vector<8x32xf32>
    %31 = arith.mulf %26, %30 : vector<8x32xf32>
    %32 = vector.broadcast %5 : vector<1x32xf32> to vector<8x32xf32>
    %33 = arith.mulf %31, %32 : vector<8x32xf32>
    %34 = vector.broadcast %7 : vector<1x32xf32> to vector<8x32xf32>
    %35 = arith.addf %33, %34 : vector<8x32xf32>
    %36 = arith.truncf %35 : vector<8x32xf32> to vector<8x32xbf16>
    %c0_21 = arith.constant 0 : index
    %c0_22 = arith.constant 0 : index
    %c0_23 = arith.constant 0 : index
    %37 = vector.load %arg4[%c0_21, %c0_22, %c0_23] : memref<1x32x96xbf16, #tpu.memory_space<vmem>>, vector<1x32x96xbf16>
    %38 = vector.shape_cast %37 : vector<1x32x96xbf16> to vector<32x96xbf16>
    %cst_24 = arith.constant dense<0.000000e+00> : vector<8x96xf32>
    %39 = tpu.matmul %36, %38, %cst_24 {dimension_numbers = #tpu.dot_dimension_numbers<[1], [0], [0], [1], [0, 0, 1, 1], [], []>} : vector<8x32xbf16>, vector<32x96xbf16>, vector<8x96xf32> -> vector<8x96xf32>
    %c0_25 = arith.constant 0 : index
    %c0_26 = arith.constant 0 : index
    %c0_27 = arith.constant 0 : index
    %40 = vector.load %arg5[%c0_25, %c0_26, %c0_27] : memref<1x1x96xbf16, #tpu.memory_space<vmem>>, vector<1x1x96xbf16>
    %41 = vector.shape_cast %40 : vector<1x1x96xbf16> to vector<1x96xbf16>
    %42 = arith.extf %41 : vector<1x96xbf16> to vector<1x96xf32>
    %43 = vector.broadcast %42 : vector<1x96xf32> to vector<8x96xf32>
    %44 = arith.addf %39, %43 : vector<8x96xf32>
    %45 = vector.extract_strided_slice %44 {offsets = [0, 0], sizes = [8, 32], strides = [1, 1]} : vector<8x96xf32> to vector<8x32xf32>
    %cst_28 = arith.constant 0.353553385 : f32
    %46 = vector.broadcast %cst_28 : f32 to vector<8x32xf32>
    %47 = arith.mulf %45, %46 : vector<8x32xf32>
    %48 = arith.truncf %47 : vector<8x32xf32> to vector<8x32xbf16>
    %49 = vector.extract_strided_slice %44 {offsets = [0, 32], sizes = [8, 32], strides = [1, 1]} : vector<8x96xf32> to vector<8x32xf32>
    %50 = arith.truncf %49 : vector<8x32xf32> to vector<8x32xbf16>
    %51 = vector.extract_strided_slice %44 {offsets = [0, 64], sizes = [8, 32], strides = [1, 1]} : vector<8x96xf32> to vector<8x32xf32>
    %52 = arith.truncf %51 : vector<8x32xf32> to vector<8x32xbf16>
    %53 = vector.extract_strided_slice %48 {offsets = [0, 0], sizes = [8, 8], strides = [1, 1]} : vector<8x32xbf16> to vector<8x8xbf16>
    %54 = vector.extract_strided_slice %50 {offsets = [0, 0], sizes = [8, 8], strides = [1, 1]} : vector<8x32xbf16> to vector<8x8xbf16>
    %cst_29 = arith.constant dense<0.000000e+00> : vector<8x8xf32>
    %55 = tpu.matmul %53, %54, %cst_29 {dimension_numbers = #tpu.dot_dimension_numbers<[1], [1], [0], [0], [0, 0, 1, 0], [], []>} : vector<8x8xbf16>, vector<8x8xbf16>, vector<8x8xf32> -> vector<8x8xf32>
    %56 = vector.broadcast %13 : vector<1x8xf32> to vector<8x8xf32>
    %57 = arith.addf %55, %56 : vector<8x8xf32>
    %cst_30 = arith.constant dense<0xFF800000> : vector<8xf32>
    %58 = vector.multi_reduction <maximumf>, %57, %cst_30 [1] : vector<8x8xf32> to vector<8xf32>
    %59 = vector.shape_cast %58 : vector<8xf32> to vector<8x1xf32>
    %60 = vector.broadcast %59 : vector<8x1xf32> to vector<8x8xf32>
    %61 = arith.subf %57, %60 : vector<8x8xf32>
    %62 = math.exp %61 : vector<8x8xf32>
    %cst_31 = arith.constant dense<0.000000e+00> : vector<8xf32>
    %63 = vector.multi_reduction <add>, %62, %cst_31 [1] : vector<8x8xf32> to vector<8xf32>
    %64 = vector.shape_cast %63 : vector<8xf32> to vector<8x1xf32>
    %65 = tpu.reciprocal %64 {approx = true} : vector<8x1xf32> -> vector<8x1xf32>
    %66 = arith.truncf %62 : vector<8x8xf32> to vector<8x8xbf16>
    %67 = vector.extract_strided_slice %52 {offsets = [0, 0], sizes = [8, 8], strides = [1, 1]} : vector<8x32xbf16> to vector<8x8xbf16>
    %cst_32 = arith.constant dense<0.000000e+00> : vector<8x8xf32>
    %68 = tpu.matmul %66, %67, %cst_32 {dimension_numbers = #tpu.dot_dimension_numbers<[1], [0], [0], [1], [0, 0, 1, 1], [], []>} : vector<8x8xbf16>, vector<8x8xbf16>, vector<8x8xf32> -> vector<8x8xf32>
    %69 = vector.broadcast %65 : vector<8x1xf32> to vector<8x8xf32>
    %70 = arith.mulf %68, %69 : vector<8x8xf32>
    %71 = arith.truncf %70 : vector<8x8xf32> to vector<8x8xbf16>
    %c0_33 = arith.constant 0 : index
    %c0_34 = arith.constant 0 : index
    %72 = vector.load %arg20[%c0_33, %c0_34] : memref<8x32xbf16, #tpu.memory_space<vmem>>, vector<8x8xbf16>
    tpu.vector_store %arg20[%c0_33, %c0_34], %71 {strides = array<i32>} : memref<8x32xbf16, #tpu.memory_space<vmem>>, vector<8x8xbf16>,
    %73 = vector.extract_strided_slice %48 {offsets = [0, 8], sizes = [8, 8], strides = [1, 1]} : vector<8x32xbf16> to vector<8x8xbf16>
    %74 = vector.extract_strided_slice %50 {offsets = [0, 8], sizes = [8, 8], strides = [1, 1]} : vector<8x32xbf16> to vector<8x8xbf16>
    %cst_35 = arith.constant dense<0.000000e+00> : vector<8x8xf32>
    %75 = tpu.matmul %73, %74, %cst_35 {dimension_numbers = #tpu.dot_dimension_numbers<[1], [1], [0], [0], [0, 0, 1, 0], [], []>} : vector<8x8xbf16>, vector<8x8xbf16>, vector<8x8xf32> -> vector<8x8xf32>
    %76 = vector.broadcast %13 : vector<1x8xf32> to vector<8x8xf32>
    %77 = arith.addf %75, %76 : vector<8x8xf32>
    %cst_36 = arith.constant dense<0xFF800000> : vector<8xf32>
    %78 = vector.multi_reduction <maximumf>, %77, %cst_36 [1] : vector<8x8xf32> to vector<8xf32>
    %79 = vector.shape_cast %78 : vector<8xf32> to vector<8x1xf32>
    %80 = vector.broadcast %79 : vector<8x1xf32> to vector<8x8xf32>
    %81 = arith.subf %77, %80 : vector<8x8xf32>
    %82 = math.exp %81 : vector<8x8xf32>
    %cst_37 = arith.constant dense<0.000000e+00> : vector<8xf32>
    %83 = vector.multi_reduction <add>, %82, %cst_37 [1] : vector<8x8xf32> to vector<8xf32>
    %84 = vector.shape_cast %83 : vector<8xf32> to vector<8x1xf32>
    %85 = tpu.reciprocal %84 {approx = true} : vector<8x1xf32> -> vector<8x1xf32>
    %86 = arith.truncf %82 : vector<8x8xf32> to vector<8x8xbf16>
    %87 = vector.extract_strided_slice %52 {offsets = [0, 8], sizes = [8, 8], strides = [1, 1]} : vector<8x32xbf16> to vector<8x8xbf16>
    %cst_38 = arith.constant dense<0.000000e+00> : vector<8x8xf32>
    %88 = tpu.matmul %86, %87, %cst_38 {dimension_numbers = #tpu.dot_dimension_numbers<[1], [0], [0], [1], [0, 0, 1, 1], [], []>} : vector<8x8xbf16>, vector<8x8xbf16>, vector<8x8xf32> -> vector<8x8xf32>
    %89 = vector.broadcast %85 : vector<8x1xf32> to vector<8x8xf32>
    %90 = arith.mulf %88, %89 : vector<8x8xf32>
    %91 = arith.truncf %90 : vector<8x8xf32> to vector<8x8xbf16>
    %c0_39 = arith.constant 0 : index
    %c8 = arith.constant 8 : index
    %92 = vector.load %arg20[%c0_39, %c8] : memref<8x32xbf16, #tpu.memory_space<vmem>>, vector<8x8xbf16>
    tpu.vector_store %arg20[%c0_39, %c8], %91 {strides = array<i32>} : memref<8x32xbf16, #tpu.memory_space<vmem>>, vector<8x8xbf16>,
    %93 = vector.extract_strided_slice %48 {offsets = [0, 16], sizes = [8, 8], strides = [1, 1]} : vector<8x32xbf16> to vector<8x8xbf16>
    %94 = vector.extract_strided_slice %50 {offsets = [0, 16], sizes = [8, 8], strides = [1, 1]} : vector<8x32xbf16> to vector<8x8xbf16>
    %cst_40 = arith.constant dense<0.000000e+00> : vector<8x8xf32>
    %95 = tpu.matmul %93, %94, %cst_40 {dimension_numbers = #tpu.dot_dimension_numbers<[1], [1], [0], [0], [0, 0, 1, 0], [], []>} : vector<8x8xbf16>, vector<8x8xbf16>, vector<8x8xf32> -> vector<8x8xf32>
    %96 = vector.broadcast %13 : vector<1x8xf32> to vector<8x8xf32>
    %97 = arith.addf %95, %96 : vector<8x8xf32>
    %cst_41 = arith.constant dense<0xFF800000> : vector<8xf32>
    %98 = vector.multi_reduction <maximumf>, %97, %cst_41 [1] : vector<8x8xf32> to vector<8xf32>
    %99 = vector.shape_cast %98 : vector<8xf32> to vector<8x1xf32>
    %100 = vector.broadcast %99 : vector<8x1xf32> to vector<8x8xf32>
    %101 = arith.subf %97, %100 : vector<8x8xf32>
    %102 = math.exp %101 : vector<8x8xf32>
    %cst_42 = arith.constant dense<0.000000e+00> : vector<8xf32>
    %103 = vector.multi_reduction <add>, %102, %cst_42 [1] : vector<8x8xf32> to vector<8xf32>
    %104 = vector.shape_cast %103 : vector<8xf32> to vector<8x1xf32>
    %105 = tpu.reciprocal %104 {approx = true} : vector<8x1xf32> -> vector<8x1xf32>
    %106 = arith.truncf %102 : vector<8x8xf32> to vector<8x8xbf16>
    %107 = vector.extract_strided_slice %52 {offsets = [0, 16], sizes = [8, 8], strides = [1, 1]} : vector<8x32xbf16> to vector<8x8xbf16>
    %cst_43 = arith.constant dense<0.000000e+00> : vector<8x8xf32>
    %108 = tpu.matmul %106, %107, %cst_43 {dimension_numbers = #tpu.dot_dimension_numbers<[1], [0], [0], [1], [0, 0, 1, 1], [], []>} : vector<8x8xbf16>, vector<8x8xbf16>, vector<8x8xf32> -> vector<8x8xf32>
    %109 = vector.broadcast %105 : vector<8x1xf32> to vector<8x8xf32>
    %110 = arith.mulf %108, %109 : vector<8x8xf32>
    %111 = arith.truncf %110 : vector<8x8xf32> to vector<8x8xbf16>
    %c0_44 = arith.constant 0 : index
    %c16 = arith.constant 16 : index
    %112 = vector.load %arg20[%c0_44, %c16] : memref<8x32xbf16, #tpu.memory_space<vmem>>, vector<8x8xbf16>
    tpu.vector_store %arg20[%c0_44, %c16], %111 {strides = array<i32>} : memref<8x32xbf16, #tpu.memory_space<vmem>>, vector<8x8xbf16>,
    %113 = vector.extract_strided_slice %48 {offsets = [0, 24], sizes = [8, 8], strides = [1, 1]} : vector<8x32xbf16> to vector<8x8xbf16>
    %114 = vector.extract_strided_slice %50 {offsets = [0, 24], sizes = [8, 8], strides = [1, 1]} : vector<8x32xbf16> to vector<8x8xbf16>
    %cst_45 = arith.constant dense<0.000000e+00> : vector<8x8xf32>
    %115 = tpu.matmul %113, %114, %cst_45 {dimension_numbers = #tpu.dot_dimension_numbers<[1], [1], [0], [0], [0, 0, 1, 0], [], []>} : vector<8x8xbf16>, vector<8x8xbf16>, vector<8x8xf32> -> vector<8x8xf32>
    %116 = vector.broadcast %13 : vector<1x8xf32> to vector<8x8xf32>
    %117 = arith.addf %115, %116 : vector<8x8xf32>
    %cst_46 = arith.constant dense<0xFF800000> : vector<8xf32>
    %118 = vector.multi_reduction <maximumf>, %117, %cst_46 [1] : vector<8x8xf32> to vector<8xf32>
    %119 = vector.shape_cast %118 : vector<8xf32> to vector<8x1xf32>
    %120 = vector.broadcast %119 : vector<8x1xf32> to vector<8x8xf32>
    %121 = arith.subf %117, %120 : vector<8x8xf32>
    %122 = math.exp %121 : vector<8x8xf32>
    %cst_47 = arith.constant dense<0.000000e+00> : vector<8xf32>
    %123 = vector.multi_reduction <add>, %122, %cst_47 [1] : vector<8x8xf32> to vector<8xf32>
    %124 = vector.shape_cast %123 : vector<8xf32> to vector<8x1xf32>
    %125 = tpu.reciprocal %124 {approx = true} : vector<8x1xf32> -> vector<8x1xf32>
    %126 = arith.truncf %122 : vector<8x8xf32> to vector<8x8xbf16>
    %127 = vector.extract_strided_slice %52 {offsets = [0, 24], sizes = [8, 8], strides = [1, 1]} : vector<8x32xbf16> to vector<8x8xbf16>
    %cst_48 = arith.constant dense<0.000000e+00> : vector<8x8xf32>
    %128 = tpu.matmul %126, %127, %cst_48 {dimension_numbers = #tpu.dot_dimension_numbers<[1], [0], [0], [1], [0, 0, 1, 1], [], []>} : vector<8x8xbf16>, vector<8x8xbf16>, vector<8x8xf32> -> vector<8x8xf32>
    %129 = vector.broadcast %125 : vector<8x1xf32> to vector<8x8xf32>
    %130 = arith.mulf %128, %129 : vector<8x8xf32>
    %131 = arith.truncf %130 : vector<8x8xf32> to vector<8x8xbf16>
    %c0_49 = arith.constant 0 : index
    %c24 = arith.constant 24 : index
    %132 = vector.load %arg20[%c0_49, %c24] : memref<8x32xbf16, #tpu.memory_space<vmem>>, vector<8x8xbf16>
    tpu.vector_store %arg20[%c0_49, %c24], %131 {strides = array<i32>} : memref<8x32xbf16, #tpu.memory_space<vmem>>, vector<8x8xbf16>,
    %c0_50 = arith.constant 0 : index
    %c0_51 = arith.constant 0 : index
    %133 = vector.load %arg20[%c0_50, %c0_51] : memref<8x32xbf16, #tpu.memory_space<vmem>>, vector<8x32xbf16>
    %c0_52 = arith.constant 0 : index
    %c0_53 = arith.constant 0 : index
    %c0_54 = arith.constant 0 : index
    %134 = vector.load %arg6[%c0_52, %c0_53, %c0_54] : memref<1x32x32xbf16, #tpu.memory_space<vmem>>, vector<1x32x32xbf16>
    %135 = vector.shape_cast %134 : vector<1x32x32xbf16> to vector<32x32xbf16>
    %cst_55 = arith.constant dense<0.000000e+00> : vector<8x32xf32>
    %136 = tpu.matmul %133, %135, %cst_55 {dimension_numbers = #tpu.dot_dimension_numbers<[1], [0], [0], [1], [0, 0, 1, 1], [], []>} : vector<8x32xbf16>, vector<32x32xbf16>, vector<8x32xf32> -> vector<8x32xf32>
    %c0_56 = arith.constant 0 : index
    %c0_57 = arith.constant 0 : index
    %c0_58 = arith.constant 0 : index
    %137 = vector.load %arg7[%c0_56, %c0_57, %c0_58] : memref<1x1x32xbf16, #tpu.memory_space<vmem>>, vector<1x1x32xbf16>
    %138 = vector.shape_cast %137 : vector<1x1x32xbf16> to vector<1x32xbf16>
    %139 = arith.extf %138 : vector<1x32xbf16> to vector<1x32xf32>
    %140 = vector.broadcast %139 : vector<1x32xf32> to vector<8x32xf32>
    %141 = arith.addf %136, %140 : vector<8x32xf32>
    %142 = arith.addf %3, %141 : vector<8x32xf32>
    %cst_59 = arith.constant dense<0.000000e+00> : vector<8xf32>
    %143 = vector.multi_reduction <add>, %142, %cst_59 [1] : vector<8x32xf32> to vector<8xf32>
    %144 = vector.shape_cast %143 : vector<8xf32> to vector<8x1xf32>
    %cst_60 = arith.constant 3.200000e+01 : f32
    %145 = vector.broadcast %cst_60 : f32 to vector<8x1xf32>
    %146 = arith.divf %144, %145 : vector<8x1xf32>
    %147 = vector.broadcast %146 : vector<8x1xf32> to vector<8x32xf32>
    %148 = arith.subf %142, %147 : vector<8x32xf32>
    %149 = arith.mulf %148, %148 : vector<8x32xf32>
    %cst_61 = arith.constant dense<0.000000e+00> : vector<8xf32>
    %150 = vector.multi_reduction <add>, %149, %cst_61 [1] : vector<8x32xf32> to vector<8xf32>
    %151 = vector.shape_cast %150 : vector<8xf32> to vector<8x1xf32>
    %cst_62 = arith.constant 3.200000e+01 : f32
    %152 = vector.broadcast %cst_62 : f32 to vector<8x1xf32>
    %153 = arith.divf %151, %152 : vector<8x1xf32>
    %154 = vector.broadcast %146 : vector<8x1xf32> to vector<8x32xf32>
    %155 = arith.subf %142, %154 : vector<8x32xf32>
    %cst_63 = arith.constant 9.99999996E-13 : f32
    %156 = vector.broadcast %cst_63 : f32 to vector<8x1xf32>
    %157 = arith.addf %153, %156 : vector<8x1xf32>
    %158 = math.rsqrt %157 : vector<8x1xf32>
    %159 = vector.broadcast %158 : vector<8x1xf32> to vector<8x32xf32>
    %160 = arith.mulf %155, %159 : vector<8x32xf32>
    %161 = vector.broadcast %9 : vector<1x32xf32> to vector<8x32xf32>
    %162 = arith.mulf %160, %161 : vector<8x32xf32>
    %163 = vector.broadcast %11 : vector<1x32xf32> to vector<8x32xf32>
    %164 = arith.addf %162, %163 : vector<8x32xf32>
    %165 = arith.truncf %164 : vector<8x32xf32> to vector<8x32xbf16>
    %c0_64 = arith.constant 0 : index
    %c0_65 = arith.constant 0 : index
    %c0_66 = arith.constant 0 : index
    %166 = vector.load %arg12[%c0_64, %c0_65, %c0_66] : memref<1x32x128xbf16, #tpu.memory_space<vmem>>, vector<1x32x128xbf16>
    %167 = vector.shape_cast %166 : vector<1x32x128xbf16> to vector<32x128xbf16>
    %cst_67 = arith.constant dense<0.000000e+00> : vector<8x128xf32>
    %168 = tpu.matmul %165, %167, %cst_67 {dimension_numbers = #tpu.dot_dimension_numbers<[1], [0], [0], [1], [0, 0, 1, 1], [], []>} : vector<8x32xbf16>, vector<32x128xbf16>, vector<8x128xf32> -> vector<8x128xf32>
    %c0_68 = arith.constant 0 : index
    %c0_69 = arith.constant 0 : index
    %c0_70 = arith.constant 0 : index
    %169 = vector.load %arg13[%c0_68, %c0_69, %c0_70] : memref<1x1x128xbf16, #tpu.memory_space<vmem>>, vector<1x1x128xbf16>
    %170 = vector.shape_cast %169 : vector<1x1x128xbf16> to vector<1x128xbf16>
    %171 = arith.extf %170 : vector<1x128xbf16> to vector<1x128xf32>
    %172 = vector.broadcast %171 : vector<1x128xf32> to vector<8x128xf32>
    %173 = arith.addf %168, %172 : vector<8x128xf32>
    %cst_71 = arith.constant 5.000000e-01 : f32
    %174 = vector.broadcast %cst_71 : f32 to vector<8x128xf32>
    %175 = arith.mulf %174, %173 : vector<8x128xf32>
    %cst_72 = arith.constant 4.471500e-02 : f32
    %176 = vector.broadcast %cst_72 : f32 to vector<8x128xf32>
    %177 = arith.mulf %176, %173 : vector<8x128xf32>
    %178 = arith.mulf %177, %173 : vector<8x128xf32>
    %179 = arith.mulf %178, %173 : vector<8x128xf32>
    %180 = arith.addf %173, %179 : vector<8x128xf32>
    %cst_73 = arith.constant 0.797884583 : f32
    %181 = vector.broadcast %cst_73 : f32 to vector<8x128xf32>
    %182 = arith.mulf %181, %180 : vector<8x128xf32>
    %183 = math.tanh %182 : vector<8x128xf32>
    %cst_74 = arith.constant 1.000000e+00 : f32
    %184 = vector.broadcast %cst_74 : f32 to vector<8x128xf32>
    %185 = arith.addf %184, %183 : vector<8x128xf32>
    %186 = arith.mulf %175, %185 : vector<8x128xf32>
    %187 = arith.truncf %186 : vector<8x128xf32> to vector<8x128xbf16>
    %c0_75 = arith.constant 0 : index
    %c0_76 = arith.constant 0 : index
    %c0_77 = arith.constant 0 : index
    %188 = vector.load %arg14[%c0_75, %c0_76, %c0_77] : memref<1x128x32xbf16, #tpu.memory_space<vmem>>, vector<1x128x32xbf16>
    %189 = vector.shape_cast %188 : vector<1x128x32xbf16> to vector<128x32xbf16>
    %cst_78 = arith.constant dense<0.000000e+00> : vector<8x32xf32>
    %190 = tpu.matmul %187, %189, %cst_78 {dimension_numbers = #tpu.dot_dimension_numbers<[1], [0], [0], [1], [0, 0, 1, 1], [], []>} : vector<8x128xbf16>, vector<128x32xbf16>, vector<8x32xf32> -> vector<8x32xf32>
    %c0_79 = arith.constant 0 : index
    %c0_80 = arith.constant 0 : index
    %c0_81 = arith.constant 0 : index
    %191 = vector.load %arg15[%c0_79, %c0_80, %c0_81] : memref<1x1x32xbf16, #tpu.memory_space<vmem>>, vector<1x1x32xbf16>
    %192 = vector.shape_cast %191 : vector<1x1x32xbf16> to vector<1x32xbf16>
    %193 = arith.extf %192 : vector<1x32xbf16> to vector<1x32xf32>
    %194 = vector.broadcast %193 : vector<1x32xf32> to vector<8x32xf32>
    %195 = arith.addf %190, %194 : vector<8x32xf32>
    %196 = arith.addf %142, %195 : vector<8x32xf32>
    %c0_82 = arith.constant 0 : index
    %c0_83 = arith.constant 0 : index
    %197 = vector.load %arg19[%c0_82, %c0_83] : memref<8x32xf32, #tpu.memory_space<vmem>>, vector<8x32xf32>
    tpu.vector_store %arg19[%c0_82, %c0_83], %196 {strides = array<i32>} : memref<8x32xf32, #tpu.memory_space<vmem>>, vector<8x32xf32>,
    %c0_84 = arith.constant 0 : index
    %c0_85 = arith.constant 0 : index
    %c0_86 = arith.constant 0 : index
    %c0_87 = arith.constant 0 : index
    %198 = vector.load %arg18[%c0_84, %c0_85, %c0_86, %c0_87] : memref<1x1x8x32xf32, #tpu.memory_space<vmem>>, vector<1x1x8x32xf32>
    %199 = vector.shape_cast %198 : vector<1x1x8x32xf32> to vector<8x32xf32>
    %200 = vector.shape_cast %196 : vector<8x32xf32> to vector<1x1x8x32xf32>
    tpu.vector_store %arg18[%c0_84, %c0_85, %c0_86, %c0_87], %200 {strides = array<i32>} : memref<1x1x8x32xf32, #tpu.memory_space<vmem>>, vector<1x1x8x32xf32>,
    return
  }
  func.func @transform_0(%arg0: i32, %arg1: i32) -> (i32, i32, i32) {
    %c0_i32 = arith.constant 0 : i32
    %c0_i32_0 = arith.constant 0 : i32
    %c0_i32_1 = arith.constant 0 : i32
    return %arg0, %c0_i32, %c0_i32_0 : i32, i32, i32
  }
  func.func @transform_1(%arg0: i32, %arg1: i32) -> (i32, i32, i32) {
    %c0_i32 = arith.constant 0 : i32
    %c0_i32_0 = arith.constant 0 : i32
    %c0_i32_1 = arith.constant 0 : i32
    return %arg0, %c0_i32, %c0_i32_0 : i32, i32, i32
  }
  func.func @transform_2(%arg0: i32, %arg1: i32) -> (i32, i32, i32) {
    %c0_i32 = arith.constant 0 : i32
    %c0_i32_0 = arith.constant 0 : i32
    %c0_i32_1 = arith.constant 0 : i32
    return %arg1, %c0_i32, %c0_i32_0 : i32, i32, i32
  }
  func.func @transform_3(%arg0: i32, %arg1: i32) -> (i32, i32, i32) {
    %c0_i32 = arith.constant 0 : i32
    %c0_i32_0 = arith.constant 0 : i32
    %c0_i32_1 = arith.constant 0 : i32
    return %arg1, %c0_i32, %c0_i32_0 : i32, i32, i32
  }
  func.func @transform_4(%arg0: i32, %arg1: i32) -> (i32, i32, i32) {
    %c0_i32 = arith.constant 0 : i32
    %c0_i32_0 = arith.constant 0 : i32
    %c0_i32_1 = arith.constant 0 : i32
    return %arg1, %c0_i32, %c0_i32_0 : i32, i32, i32
  }
  func.func @transform_5(%arg0: i32, %arg1: i32) -> (i32, i32, i32) {
    %c0_i32 = arith.constant 0 : i32
    %c0_i32_0 = arith.constant 0 : i32
    %c0_i32_1 = arith.constant 0 : i32
    return %arg1, %c0_i32, %c0_i32_0 : i32, i32, i32
  }
  func.func @transform_6(%arg0: i32, %arg1: i32) -> (i32, i32, i32) {
    %c0_i32 = arith.constant 0 : i32
    %c0_i32_0 = arith.constant 0 : i32
    %c0_i32_1 = arith.constant 0 : i32
    return %arg1, %c0_i32, %c0_i32_0 : i32, i32, i32
  }
  func.func @transform_7(%arg0: i32, %arg1: i32) -> (i32, i32, i32) {
    %c0_i32 = arith.constant 0 : i32
    %c0_i32_0 = arith.constant 0 : i32
    %c0_i32_1 = arith.constant 0 : i32
    return %arg1, %c0_i32, %c0_i32_0 : i32, i32, i32
  }
  func.func @transform_8(%arg0: i32, %arg1: i32) -> (i32, i32, i32) {
    %c0_i32 = arith.constant 0 : i32
    %c0_i32_0 = arith.constant 0 : i32
    %c0_i32_1 = arith.constant 0 : i32
    return %arg1, %c0_i32, %c0_i32_0 : i32, i32, i32
  }
  func.func @transform_9(%arg0: i32, %arg1: i32) -> (i32, i32, i32) {
    %c0_i32 = arith.constant 0 : i32
    %c0_i32_0 = arith.constant 0 : i32
    %c0_i32_1 = arith.constant 0 : i32
    return %arg1, %c0_i32, %c0_i32_0 : i32, i32, i32
  }
  func.func @transform_10(%arg0: i32, %arg1: i32) -> (i32, i32, i32) {
    %c0_i32 = arith.constant 0 : i32
    %c0_i32_0 = arith.constant 0 : i32
    %c0_i32_1 = arith.constant 0 : i32
    return %arg1, %c0_i32, %c0_i32_0 : i32, i32, i32
  }
  func.func @transform_11(%arg0: i32, %arg1: i32) -> (i32, i32, i32) {
    %c0_i32 = arith.constant 0 : i32
    %c0_i32_0 = arith.constant 0 : i32
    %c0_i32_1 = arith.constant 0 : i32
    return %arg1, %c0_i32, %c0_i32_0 : i32, i32, i32
  }
  func.func @transform_12(%arg0: i32, %arg1: i32) -> (i32, i32, i32) {
    %c0_i32 = arith.constant 0 : i32
    %c0_i32_0 = arith.constant 0 : i32
    %c0_i32_1 = arith.constant 0 : i32
    return %arg1, %c0_i32, %c0_i32_0 : i32, i32, i32
  }
  func.func @transform_13(%arg0: i32, %arg1: i32) -> (i32, i32, i32) {
    %c0_i32 = arith.constant 0 : i32
    %c0_i32_0 = arith.constant 0 : i32
    %c0_i32_1 = arith.constant 0 : i32
    return %arg1, %c0_i32, %c0_i32_0 : i32, i32, i32
  }
  func.func @transform_14(%arg0: i32, %arg1: i32) -> (i32, i32) {
    %c0_i32 = arith.constant 0 : i32
    %c0_i32_0 = arith.constant 0 : i32
    %c0_i32_1 = arith.constant 0 : i32
    return %c0_i32, %c0_i32_0 : i32, i32
  }
  func.func @transform_15(%arg0: i32, %arg1: i32) -> (i32, i32) {
    %c0_i32 = arith.constant 0 : i32
    %c0_i32_0 = arith.constant 0 : i32
    %c0_i32_1 = arith.constant 0 : i32
    return %c0_i32, %c0_i32_0 : i32, i32
  }
  func.func @transform_16(%arg0: i32, %arg1: i32) -> (i32, i32, i32, i32) {
    %c0_i32 = arith.constant 0 : i32
    %c0_i32_0 = arith.constant 0 : i32
    %c0_i32_1 = arith.constant 0 : i32
    return %arg0, %arg1, %c0_i32, %c0_i32_0 : i32, i32, i32, i32
  }
}

</mosaic_0001>

<llo_original>
// kernel: tpu_custom_call.1
$region0: #{tpu_custom_call.1}
  #allocation0 [shape = 'u32[]', space=smem, size = 0x4, offset = 0x4, fixed_abs, tag = 'smem constant byte address 0x4 - core index']
  #allocation1 [shape = 'u32[144,128]{1,0:T(1,128)}', space=vmem, size = 0x12000, scoped, tag = 'internal scratch']
  #allocation2 [shape = 'f32[8,32]{1,0:T(8,128)}', space=vmem, size = 0x1000, scoped, tag = 'scratch operand']
  #allocation3 [shape = 'bf16[8,32]{1,0:T(8,128)(2,1)}', space=vmem, size = 0x800, scoped, tag = 'scratch operand']
  %s0 = inlined_call_operand.vmem [shape: f32[2,8,32], index: 0, kind: input, shape index: {}]
  %s1 = inlined_call_operand.vmem [shape: f32[2,1,8], index: 1, kind: input, shape index: {}]
  %s2 = inlined_call_operand.vmem [shape: bf16[2,32,96], index: 2, kind: input, shape index: {}]
  %s3 = inlined_call_operand.vmem [shape: bf16[2,1,96], index: 3, kind: input, shape index: {}]
  %s4 = inlined_call_operand.vmem [shape: bf16[2,32,32], index: 4, kind: input, shape index: {}]
  %s5 = inlined_call_operand.vmem [shape: bf16[2,1,32], index: 5, kind: input, shape index: {}]
  %s6 = inlined_call_operand.vmem [shape: f32[2,1,32], index: 6, kind: input, shape index: {}]
  %s7 = inlined_call_operand.vmem [shape: f32[2,1,32], index: 7, kind: input, shape index: {}]
  %s8 = inlined_call_operand.vmem [shape: f32[2,1,32], index: 8, kind: input, shape index: {}]
  %s9 = inlined_call_operand.vmem [shape: f32[2,1,32], index: 9, kind: input, shape index: {}]
  %s10 = inlined_call_operand.vmem [shape: bf16[2,32,128], index: 10, kind: input, shape index: {}]
  %s11 = inlined_call_operand.vmem [shape: bf16[2,1,128], index: 11, kind: input, shape index: {}]
  %s12 = inlined_call_operand.vmem [shape: bf16[2,128,32], index: 12, kind: input, shape index: {}]
  %s13 = inlined_call_operand.vmem [shape: bf16[2,1,32], index: 13, kind: input, shape index: {}]
  %s14 = inlined_call_operand.vmem [shape: f32[1,32], index: 14, kind: input, shape index: {}]
  %s15 = inlined_call_operand.vmem [shape: f32[1,32], index: 15, kind: input, shape index: {}]
  %s16 = inlined_call_operand.hbm [shape: f32[2,2,8,32], index: 16, kind: output, shape index: {}]
  %s17 = sld [smem:[#allocation0]]
  $region101: #{tpu_custom_call.1} parent=0
    _
  %s19 = ssub.s32 1, %s17
  %s20 = scalar_select 0, %s19, %s17
  $region1: #{tpu_custom_call.1} parent=0
    #allocation4 [shape = 'u8[8192]{0}', space=vmem, size = 0x2000, scoped, tag = 'output window, operand 0']
    #allocation5 [shape = 's32[2]{0}', space=sflag, size = 0x8, scoped, tag = 'scoped memory for tpu_custom_call.1']
    %21 = vsyncpa [#allocation5], 0
    %s22 = scalar_lea.sflag [#allocation5], 1
    %23 = vsyncpa %s22, 0
    loop: start=0, step=1, limit=6
    $region2: #{tpu_custom_call.1} parent=1 // loop_pre_header
      _
    $region3: #{tpu_custom_call.1} parent=1 // loop_header
      %s25 = sphi 0, %s29
      %p26 = scmp.ge.s32.totalorder %s25, 6
      %s32 = sphi 0, %s44
      %s33 = sphi 0, %s40
      %s34 = sphi 0, %s32
      %s35 = sphi 0, %s33
      %s36 = sphi 0, %s34
      %s37 = sphi 0, %s35
      %s47 = sphi 0, %s49
      %s50 = sphi 0, %s47
      %s51 = sphi 0, %s50
      %s67 = sphi 0, %s51
      %s73 = sphi 0, %s75
      %s76 = sphi 0, %s73
      %s77 = sphi 0, %s76
      %s93 = sphi 0, %s77
      %s99 = sphi 0, %s101
      %s102 = sphi 0, %s99
      %s103 = sphi 0, %s102
      %s119 = sphi 0, %s103
      %s125 = sphi 0, %s127
      %s128 = sphi 0, %s125
      %s129 = sphi 0, %s128
      %s145 = sphi 0, %s129
      %s151 = sphi 0, %s153
      %s154 = sphi 0, %s151
      %s155 = sphi 0, %s154
      %s171 = sphi 0, %s155
      %s177 = sphi 0, %s179
      %s180 = sphi 0, %s177
      %s181 = sphi 0, %s180
      %s197 = sphi 0, %s181
      %s203 = sphi 0, %s205
      %s206 = sphi 0, %s203
      %s207 = sphi 0, %s206
      %s223 = sphi 0, %s207
      %s229 = sphi 0, %s231
      %s232 = sphi 0, %s229
      %s233 = sphi 0, %s232
      %s249 = sphi 0, %s233
      %s255 = sphi 0, %s257
      %s258 = sphi 0, %s255
      %s259 = sphi 0, %s258
      %s275 = sphi 0, %s259
      %s281 = sphi 0, %s283
      %s284 = sphi 0, %s281
      %s285 = sphi 0, %s284
      %s301 = sphi 0, %s285
      %s307 = sphi 0, %s309
      %s310 = sphi 0, %s307
      %s311 = sphi 0, %s310
      %s327 = sphi 0, %s311
      %s333 = sphi 0, %s335
      %s336 = sphi 0, %s333
      %s337 = sphi 0, %s336
      %s353 = sphi 0, %s337
      %s359 = sphi 0, %s361
      %s362 = sphi 0, %s359
      %s363 = sphi 0, %s362
      %s379 = sphi 0, %s363
      %s385 = sphi 0, %s387
      %s388 = sphi 0, %s385
      %s389 = sphi 0, %s388
      %s405 = sphi 0, %s389
      %s409 = sphi 0, %s409
      %s411 = sphi 0, %s409
      %s412 = sphi 0, %s411
      %s426 = sphi 0, %s412
      %s430 = sphi 0, %s430
      %s432 = sphi 0, %s430
      %s433 = sphi 0, %s432
      %s447 = sphi 0, %s433
      %s455 = sphi 0, %s457
      %s458 = sphi 0, %s455
      %s459 = sphi 0, %s458
      %s475 = sphi 0, %s459
    $region4: #{tpu_custom_call.1} parent=1 // loop_header_branch
      %28 = sbr.rel (%p26) target = $region8
    $region5: #{tpu_custom_call.1} parent=1 // loop_body
      %s30 = ssub.s32 %s25, 1
      %s31 = ssub.s32 %s25, 2
      %s38 = sadd.s32 1, %s33
      %p39 = scmp.ge.s32.totalorder %s38, 2
      %s40 = scalar_select %p39, 0, %s38
      %s41 = sadd.s32 1, %s32
      %s42 = scalar_select %p39, %s41, %s32
      %p43 = scmp.ge.s32.totalorder %s42, 2
      %s44 = scalar_select %p43, 0, %s42
      %s45 = ssub.s32 %s32, %s44
      %p46 = scmp.eq.s32.totalorder %s45, 0
      %s48 = sadd.s32 %s47, 1
      %s49 = scalar_select %p46, %s47, %s48
      %p52 = pneg %p46
      %p53 = scmp.eq.s32.totalorder %s25, 3
      %p54 = por %p52, %p53
      %p55 = scmp.ne.s32.totalorder %s47, %s50
      %p56 = scmp.eq.s32.totalorder %s25, 0
      %p57 = por %p55, %p56
      %p58 = scmp.ne.s32.totalorder %s47, %s50
      %p59 = scmp.eq.s32.totalorder %s30, 3
      %p60 = por %p58, %p59
      %p61 = scmp.ne.s32.totalorder %s50, %s51
      %p62 = scmp.eq.s32.totalorder %s30, 0
      %p63 = por %p61, %p62
      %p64 = scmp.ne.s32.totalorder %s50, %s51
      %p65 = scmp.eq.s32.totalorder %s31, 3
      %p66 = por %p64, %p65
      %p68 = scmp.ne.s32.totalorder %s51, %s67
      %p69 = scmp.eq.s32.totalorder %s31, 0
      %p70 = por %p68, %p69
      %s71 = ssub.s32 %s32, %s44
      %p72 = scmp.eq.s32.totalorder %s71, 0
      %s74 = sadd.s32 %s73, 1
      %s75 = scalar_select %p72, %s73, %s74
      %p78 = pneg %p72
      %p79 = scmp.eq.s32.totalorder %s25, 3
      %p80 = por %p78, %p79
      %p81 = scmp.ne.s32.totalorder %s73, %s76
      %p82 = scmp.eq.s32.totalorder %s25, 0
      %p83 = por %p81, %p82
      %p84 = scmp.ne.s32.totalorder %s73, %s76
      %p85 = scmp.eq.s32.totalorder %s30, 3
      %p86 = por %p84, %p85
      %p87 = scmp.ne.s32.totalorder %s76, %s77
      %p88 = scmp.eq.s32.totalorder %s30, 0
      %p89 = por %p87, %p88
      %p90 = scmp.ne.s32.totalorder %s76, %s77
      %p91 = scmp.eq.s32.totalorder %s31, 3
      %p92 = por %p90, %p91
      %p94 = scmp.ne.s32.totalorder %s77, %s93
      %p95 = scmp.eq.s32.totalorder %s31, 0
      %p96 = por %p94, %p95
      %s97 = ssub.s32 %s33, %s40
      %p98 = scmp.eq.s32.totalorder %s97, 0
      %s100 = sadd.s32 %s99, 1
      %s101 = scalar_select %p98, %s99, %s100
      %p104 = pneg %p98
      %p105 = scmp.eq.s32.totalorder %s25, 3
      %p106 = por %p104, %p105
      %p107 = scmp.ne.s32.totalorder %s99, %s102
      %p108 = scmp.eq.s32.totalorder %s25, 0
      %p109 = por %p107, %p108
      %p110 = scmp.ne.s32.totalorder %s99, %s102
      %p111 = scmp.eq.s32.totalorder %s30, 3
      %p112 = por %p110, %p111
      %p113 = scmp.ne.s32.totalorder %s102, %s103
      %p114 = scmp.eq.s32.totalorder %s30, 0
      %p115 = por %p113, %p114
      %p116 = scmp.ne.s32.totalorder %s102, %s103
      %p117 = scmp.eq.s32.totalorder %s31, 3
      %p118 = por %p116, %p117
      %p120 = scmp.ne.s32.totalorder %s103, %s119
      %p121 = scmp.eq.s32.totalorder %s31, 0
      %p122 = por %p120, %p121
      %s123 = ssub.s32 %s33, %s40
      %p124 = scmp.eq.s32.totalorder %s123, 0
      %s126 = sadd.s32 %s125, 1
      %s127 = scalar_select %p124, %s125, %s126
      %p130 = pneg %p124
      %p131 = scmp.eq.s32.totalorder %s25, 3
      %p132 = por %p130, %p131
      %p133 = scmp.ne.s32.totalorder %s125, %s128
      %p134 = scmp.eq.s32.totalorder %s25, 0
      %p135 = por %p133, %p134
      %p136 = scmp.ne.s32.totalorder %s125, %s128
      %p137 = scmp.eq.s32.totalorder %s30, 3
      %p138 = por %p136, %p137
      %p139 = scmp.ne.s32.totalorder %s128, %s129
      %p140 = scmp.eq.s32.totalorder %s30, 0
      %p141 = por %p139, %p140
      %p142 = scmp.ne.s32.totalorder %s128, %s129
      %p143 = scmp.eq.s32.totalorder %s31, 3
      %p144 = por %p142, %p143
      %p146 = scmp.ne.s32.totalorder %s129, %s145
      %p147 = scmp.eq.s32.totalorder %s31, 0
      %p148 = por %p146, %p147
      %s149 = ssub.s32 %s33, %s40
      %p150 = scmp.eq.s32.totalorder %s149, 0
      %s152 = sadd.s32 %s151, 1
      %s153 = scalar_select %p150, %s151, %s152
      %p156 = pneg %p150
      %p157 = scmp.eq.s32.totalorder %s25, 3
      %p158 = por %p156, %p157
      %p159 = scmp.ne.s32.totalorder %s151, %s154
      %p160 = scmp.eq.s32.totalorder %s25, 0
      %p161 = por %p159, %p160
      %p162 = scmp.ne.s32.totalorder %s151, %s154
      %p163 = scmp.eq.s32.totalorder %s30, 3
      %p164 = por %p162, %p163
      %p165 = scmp.ne.s32.totalorder %s154, %s155
      %p166 = scmp.eq.s32.totalorder %s30, 0
      %p167 = por %p165, %p166
      %p168 = scmp.ne.s32.totalorder %s154, %s155
      %p169 = scmp.eq.s32.totalorder %s31, 3
      %p170 = por %p168, %p169
      %p172 = scmp.ne.s32.totalorder %s155, %s171
      %p173 = scmp.eq.s32.totalorder %s31, 0
      %p174 = por %p172, %p173
      %s175 = ssub.s32 %s33, %s40
      %p176 = scmp.eq.s32.totalorder %s175, 0
      %s178 = sadd.s32 %s177, 1
      %s179 = scalar_select %p176, %s177, %s178
      %p182 = pneg %p176
      %p183 = scmp.eq.s32.totalorder %s25, 3
      %p184 = por %p182, %p183
      %p185 = scmp.ne.s32.totalorder %s177, %s180
      %p186 = scmp.eq.s32.totalorder %s25, 0
      %p187 = por %p185, %p186
      %p188 = scmp.ne.s32.totalorder %s177, %s180
      %p189 = scmp.eq.s32.totalorder %s30, 3
      %p190 = por %p188, %p189
      %p191 = scmp.ne.s32.totalorder %s180, %s181
      %p192 = scmp.eq.s32.totalorder %s30, 0
      %p193 = por %p191, %p192
      %p194 = scmp.ne.s32.totalorder %s180, %s181
      %p195 = scmp.eq.s32.totalorder %s31, 3
      %p196 = por %p194, %p195
      %p198 = scmp.ne.s32.totalorder %s181, %s197
      %p199 = scmp.eq.s32.totalorder %s31, 0
      %p200 = por %p198, %p199
      %s201 = ssub.s32 %s33, %s40
      %p202 = scmp.eq.s32.totalorder %s201, 0
      %s204 = sadd.s32 %s203, 1
      %s205 = scalar_select %p202, %s203, %s204
      %p208 = pneg %p202
      %p209 = scmp.eq.s32.totalorder %s25, 3
      %p210 = por %p208, %p209
      %p211 = scmp.ne.s32.totalorder %s203, %s206
      %p212 = scmp.eq.s32.totalorder %s25, 0
      %p213 = por %p211, %p212
      %p214 = scmp.ne.s32.totalorder %s203, %s206
      %p215 = scmp.eq.s32.totalorder %s30, 3
      %p216 = por %p214, %p215
      %p217 = scmp.ne.s32.totalorder %s206, %s207
      %p218 = scmp.eq.s32.totalorder %s30, 0
      %p219 = por %p217, %p218
      %p220 = scmp.ne.s32.totalorder %s206, %s207
      %p221 = scmp.eq.s32.totalorder %s31, 3
      %p222 = por %p220, %p221
      %p224 = scmp.ne.s32.totalorder %s207, %s223
      %p225 = scmp.eq.s32.totalorder %s31, 0
      %p226 = por %p224, %p225
      %s227 = ssub.s32 %s33, %s40
      %p228 = scmp.eq.s32.totalorder %s227, 0
      %s230 = sadd.s32 %s229, 1
      %s231 = scalar_select %p228, %s229, %s230
      %p234 = pneg %p228
      %p235 = scmp.eq.s32.totalorder %s25, 3
      %p236 = por %p234, %p235
      %p237 = scmp.ne.s32.totalorder %s229, %s232
      %p238 = scmp.eq.s32.totalorder %s25, 0
      %p239 = por %p237, %p238
      %p240 = scmp.ne.s32.totalorder %s229, %s232
      %p241 = scmp.eq.s32.totalorder %s30, 3
      %p242 = por %p240, %p241
      %p243 = scmp.ne.s32.totalorder %s232, %s233
      %p244 = scmp.eq.s32.totalorder %s30, 0
      %p245 = por %p243, %p244
      %p246 = scmp.ne.s32.totalorder %s232, %s233
      %p247 = scmp.eq.s32.totalorder %s31, 3
      %p248 = por %p246, %p247
      %p250 = scmp.ne.s32.totalorder %s233, %s249
      %p251 = scmp.eq.s32.totalorder %s31, 0
      %p252 = por %p250, %p251
      %s253 = ssub.s32 %s33, %s40
      %p254 = scmp.eq.s32.totalorder %s253, 0
      %s256 = sadd.s32 %s255, 1
      %s257 = scalar_select %p254, %s255, %s256
      %p260 = pneg %p254
      %p261 = scmp.eq.s32.totalorder %s25, 3
      %p262 = por %p260, %p261
      %p263 = scmp.ne.s32.totalorder %s255, %s258
      %p264 = scmp.eq.s32.totalorder %s25, 0
      %p265 = por %p263, %p264
      %p266 = scmp.ne.s32.totalorder %s255, %s258
      %p267 = scmp.eq.s32.totalorder %s30, 3
      %p268 = por %p266, %p267
      %p269 = scmp.ne.s32.totalorder %s258, %s259
      %p270 = scmp.eq.s32.totalorder %s30, 0
      %p271 = por %p269, %p270
      %p272 = scmp.ne.s32.totalorder %s258, %s259
      %p273 = scmp.eq.s32.totalorder %s31, 3
      %p274 = por %p272, %p273
      %p276 = scmp.ne.s32.totalorder %s259, %s275
      %p277 = scmp.eq.s32.totalorder %s31, 0
      %p278 = por %p276, %p277
      %s279 = ssub.s32 %s33, %s40
      %p280 = scmp.eq.s32.totalorder %s279, 0
      %s282 = sadd.s32 %s281, 1
      %s283 = scalar_select %p280, %s281, %s282
      %p286 = pneg %p280
      %p287 = scmp.eq.s32.totalorder %s25, 3
      %p288 = por %p286, %p287
      %p289 = scmp.ne.s32.totalorder %s281, %s284
      %p290 = scmp.eq.s32.totalorder %s25, 0
      %p291 = por %p289, %p290
      %p292 = scmp.ne.s32.totalorder %s281, %s284
      %p293 = scmp.eq.s32.totalorder %s30, 3
      %p294 = por %p292, %p293
      %p295 = scmp.ne.s32.totalorder %s284, %s285
      %p296 = scmp.eq.s32.totalorder %s30, 0
      %p297 = por %p295, %p296
      %p298 = scmp.ne.s32.totalorder %s284, %s285
      %p299 = scmp.eq.s32.totalorder %s31, 3
      %p300 = por %p298, %p299
      %p302 = scmp.ne.s32.totalorder %s285, %s301
      %p303 = scmp.eq.s32.totalorder %s31, 0
      %p304 = por %p302, %p303
      %s305 = ssub.s32 %s33, %s40
      %p306 = scmp.eq.s32.totalorder %s305, 0
      %s308 = sadd.s32 %s307, 1
      %s309 = scalar_select %p306, %s307, %s308
      %p312 = pneg %p306
      %p313 = scmp.eq.s32.totalorder %s25, 3
      %p314 = por %p312, %p313
      %p315 = scmp.ne.s32.totalorder %s307, %s310
      %p316 = scmp.eq.s32.totalorder %s25, 0
      %p317 = por %p315, %p316
      %p318 = scmp.ne.s32.totalorder %s307, %s310
      %p319 = scmp.eq.s32.totalorder %s30, 3
      %p320 = por %p318, %p319
      %p321 = scmp.ne.s32.totalorder %s310, %s311
      %p322 = scmp.eq.s32.totalorder %s30, 0
      %p323 = por %p321, %p322
      %p324 = scmp.ne.s32.totalorder %s310, %s311
      %p325 = scmp.eq.s32.totalorder %s31, 3
      %p326 = por %p324, %p325
      %p328 = scmp.ne.s32.totalorder %s311, %s327
      %p329 = scmp.eq.s32.totalorder %s31, 0
      %p330 = por %p328, %p329
      %s331 = ssub.s32 %s33, %s40
      %p332 = scmp.eq.s32.totalorder %s331, 0
      %s334 = sadd.s32 %s333, 1
      %s335 = scalar_select %p332, %s333, %s334
      %p338 = pneg %p332
      %p339 = scmp.eq.s32.totalorder %s25, 3
      %p340 = por %p338, %p339
      %p341 = scmp.ne.s32.totalorder %s333, %s336
      %p342 = scmp.eq.s32.totalorder %s25, 0
      %p343 = por %p341, %p342
      %p344 = scmp.ne.s32.totalorder %s333, %s336
      %p345 = scmp.eq.s32.totalorder %s30, 3
      %p346 = por %p344, %p345
      %p347 = scmp.ne.s32.totalorder %s336, %s337
      %p348 = scmp.eq.s32.totalorder %s30, 0
      %p349 = por %p347, %p348
      %p350 = scmp.ne.s32.totalorder %s336, %s337
      %p351 = scmp.eq.s32.totalorder %s31, 3
      %p352 = por %p350, %p351
      %p354 = scmp.ne.s32.totalorder %s337, %s353
      %p355 = scmp.eq.s32.totalorder %s31, 0
      %p356 = por %p354, %p355
      %s357 = ssub.s32 %s33, %s40
      %p358 = scmp.eq.s32.totalorder %s357, 0
      %s360 = sadd.s32 %s359, 1
      %s361 = scalar_select %p358, %s359, %s360
      %p364 = pneg %p358
      %p365 = scmp.eq.s32.totalorder %s25, 3
      %p366 = por %p364, %p365
      %p367 = scmp.ne.s32.totalorder %s359, %s362
      %p368 = scmp.eq.s32.totalorder %s25, 0
      %p369 = por %p367, %p368
      %p370 = scmp.ne.s32.totalorder %s359, %s362
      %p371 = scmp.eq.s32.totalorder %s30, 3
      %p372 = por %p370, %p371
      %p373 = scmp.ne.s32.totalorder %s362, %s363
      %p374 = scmp.eq.s32.totalorder %s30, 0
      %p375 = por %p373, %p374
      %p376 = scmp.ne.s32.totalorder %s362, %s363
      %p377 = scmp.eq.s32.totalorder %s31, 3
      %p378 = por %p376, %p377
      %p380 = scmp.ne.s32.totalorder %s363, %s379
      %p381 = scmp.eq.s32.totalorder %s31, 0
      %p382 = por %p380, %p381
      %s383 = ssub.s32 %s33, %s40
      %p384 = scmp.eq.s32.totalorder %s383, 0
      %s386 = sadd.s32 %s385, 1
      %s387 = scalar_select %p384, %s385, %s386
      %p390 = pneg %p384
      %p391 = scmp.eq.s32.totalorder %s25, 3
      %p392 = por %p390, %p391
      %p393 = scmp.ne.s32.totalorder %s385, %s388
      %p394 = scmp.eq.s32.totalorder %s25, 0
      %p395 = por %p393, %p394
      %p396 = scmp.ne.s32.totalorder %s385, %s388
      %p397 = scmp.eq.s32.totalorder %s30, 3
      %p398 = por %p396, %p397
      %p399 = scmp.ne.s32.totalorder %s388, %s389
      %p400 = scmp.eq.s32.totalorder %s30, 0
      %p401 = por %p399, %p400
      %p402 = scmp.ne.s32.totalorder %s388, %s389
      %p403 = scmp.eq.s32.totalorder %s31, 3
      %p404 = por %p402, %p403
      %p406 = scmp.ne.s32.totalorder %s389, %s405
      %p407 = scmp.eq.s32.totalorder %s31, 0
      %p408 = por %p406, %p407
      %s410 = sadd.s32 %s409, 1
      %p413 = scmp.eq.s32.totalorder %s25, 3
      %p414 = scmp.ne.s32.totalorder %s409, %s411
      %p415 = scmp.eq.s32.totalorder %s25, 0
      %p416 = por %p414, %p415
      %p417 = scmp.ne.s32.totalorder %s409, %s411
      %p418 = scmp.eq.s32.totalorder %s30, 3
      %p419 = por %p417, %p418
      %p420 = scmp.ne.s32.totalorder %s411, %s412
      %p421 = scmp.eq.s32.totalorder %s30, 0
      %p422 = por %p420, %p421
      %p423 = scmp.ne.s32.totalorder %s411, %s412
      %p424 = scmp.eq.s32.totalorder %s31, 3
      %p425 = por %p423, %p424
      %p427 = scmp.ne.s32.totalorder %s412, %s426
      %p428 = scmp.eq.s32.totalorder %s31, 0
      %p429 = por %p427, %p428
      %s431 = sadd.s32 %s430, 1
      %p434 = scmp.eq.s32.totalorder %s25, 3
      %p435 = scmp.ne.s32.totalorder %s430, %s432
      %p436 = scmp.eq.s32.totalorder %s25, 0
      %p437 = por %p435, %p436
      %p438 = scmp.ne.s32.totalorder %s430, %s432
      %p439 = scmp.eq.s32.totalorder %s30, 3
      %p440 = por %p438, %p439
      %p441 = scmp.ne.s32.totalorder %s432, %s433
      %p442 = scmp.eq.s32.totalorder %s30, 0
      %p443 = por %p441, %p442
      %p444 = scmp.ne.s32.totalorder %s432, %s433
      %p445 = scmp.eq.s32.totalorder %s31, 3
      %p446 = por %p444, %p445
      %p448 = scmp.ne.s32.totalorder %s433, %s447
      %p449 = scmp.eq.s32.totalorder %s31, 0
      %p450 = por %p448, %p449
      %s451 = ssub.s32 %s32, %s44
      %s452 = ssub.s32 %s33, %s40
      %s453 = sor.u32 %s451, %s452
      %p454 = scmp.eq.s32.totalorder %s453, 0
      %s456 = sadd.s32 %s455, 1
      %s457 = scalar_select %p454, %s455, %s456
      %p460 = pneg %p454
      %p461 = scmp.eq.s32.totalorder %s25, 3
      %p462 = por %p460, %p461
      %p463 = scmp.ne.s32.totalorder %s455, %s458
      %p464 = scmp.eq.s32.totalorder %s25, 0
      %p465 = por %p463, %p464
      %p466 = scmp.ne.s32.totalorder %s455, %s458
      %p467 = scmp.eq.s32.totalorder %s30, 3
      %p468 = por %p466, %p467
      %p469 = scmp.ne.s32.totalorder %s458, %s459
      %p470 = scmp.eq.s32.totalorder %s30, 0
      %p471 = por %p469, %p470
      %p472 = scmp.ne.s32.totalorder %s458, %s459
      %p473 = scmp.eq.s32.totalorder %s31, 3
      %p474 = por %p472, %p473
      %p476 = scmp.ne.s32.totalorder %s459, %s475
      %p477 = scmp.eq.s32.totalorder %s31, 0
      %p478 = por %p476, %p477
      %p479 = scmp.le.s32.totalorder 1, %s25
      %p480 = scmp.lt.s32.totalorder %s25, 5
      %p481 = pnand %p479, %p480
      %p482 = pneg %p481
      // Predicated region
      $region9: #{tpu_custom_call.1} parent=5 // pred_check
        _
      $region10: #{tpu_custom_call.1} parent=5 // pred_check_branch
        %484 = sbr.rel (%p481) target = $region12
      $region11: #{tpu_custom_call.1} parent=5 // pred_region
        %s485 = ssub.s32 %s25, 1
        // Predicated region
        $region13: #{tpu_custom_call.1} parent=11 // pred_check
          %p486 = pneg %p422
        $region14: #{tpu_custom_call.1} parent=11 // pred_check_branch
          %488 = sbr.rel (%p486) target = $region16
        $region15: #{tpu_custom_call.1} parent=11 // pred_region
          _
        $region16: #{tpu_custom_call.1} parent=11 // pred_fallthru
          _
        // Predicated region
        $region17: #{tpu_custom_call.1} parent=11 // pred_check
          %p489 = pneg %p443
        $region18: #{tpu_custom_call.1} parent=11 // pred_check_branch
          %491 = sbr.rel (%p489) target = $region20
        $region19: #{tpu_custom_call.1} parent=11 // pred_region
          _
        $region20: #{tpu_custom_call.1} parent=11 // pred_fallthru
          _
      $region12: #{tpu_custom_call.1} parent=5 // pred_fallthru
        _
      %p492 = scmp.lt.s32.totalorder %s25, 4
      // Predicated region
      $region21: #{tpu_custom_call.1} parent=5 // pred_check
        %p493 = pneg %p492
      $region22: #{tpu_custom_call.1} parent=5 // pred_check_branch
        %495 = sbr.rel (%p493) target = $region24
      $region23: #{tpu_custom_call.1} parent=5 // pred_region
        // Predicated region
        $region25: #{tpu_custom_call.1} parent=23 // pred_check
          %p496 = pneg %p57
        $region26: #{tpu_custom_call.1} parent=23 // pred_check_branch
          %498 = sbr.rel (%p496) target = $region28
        $region27: #{tpu_custom_call.1} parent=23 // pred_region
          %p499 = scmp.lt.s32.totalorder %s32, 1
          %s500 = scalar_select %p499, %s32, 1
          %s501 = smul.addr %s500, 8
          %s502 = scalar_lea.vmem %s0, %s501
        $region28: #{tpu_custom_call.1} parent=23 // pred_fallthru
          _
        // Predicated region
        $region29: #{tpu_custom_call.1} parent=23 // pred_check
          %p503 = pneg %p83
        $region30: #{tpu_custom_call.1} parent=23 // pred_check_branch
          %505 = sbr.rel (%p503) target = $region32
        $region31: #{tpu_custom_call.1} parent=23 // pred_region
          %p506 = scmp.lt.s32.totalorder %s32, 1
          %s507 = scalar_select %p506, %s32, 1
          %s508 = scalar_lea.vmem %s1, %s507
        $region32: #{tpu_custom_call.1} parent=23 // pred_fallthru
          _
        // Predicated region
        $region33: #{tpu_custom_call.1} parent=23 // pred_check
          %p509 = pneg %p109
        $region34: #{tpu_custom_call.1} parent=23 // pred_check_branch
          %511 = sbr.rel (%p509) target = $region36
        $region35: #{tpu_custom_call.1} parent=23 // pred_region
          %p512 = scmp.lt.s32.totalorder %s33, 1
          %s513 = scalar_select %p512, %s33, 1
          %s514 = smul.addr %s513, 4
          %s515 = smul.addr %s514, 4
          %s516 = scalar_lea.vmem %s2, %s515
        $region36: #{tpu_custom_call.1} parent=23 // pred_fallthru
          _
        // Predicated region
        $region37: #{tpu_custom_call.1} parent=23 // pred_check
          %p517 = pneg %p135
        $region38: #{tpu_custom_call.1} parent=23 // pred_check_branch
          %519 = sbr.rel (%p517) target = $region40
        $region39: #{tpu_custom_call.1} parent=23 // pred_region
          %p520 = scmp.lt.s32.totalorder %s33, 1
          %s521 = scalar_select %p520, %s33, 1
          %s522 = scalar_lea.vmem %s3, %s521
        $region40: #{tpu_custom_call.1} parent=23 // pred_fallthru
          _
        // Predicated region
        $region41: #{tpu_custom_call.1} parent=23 // pred_check
          %p523 = pneg %p161
        $region42: #{tpu_custom_call.1} parent=23 // pred_check_branch
          %525 = sbr.rel (%p523) target = $region44
        $region43: #{tpu_custom_call.1} parent=23 // pred_region
          %p526 = scmp.lt.s32.totalorder %s33, 1
          %s527 = scalar_select %p526, %s33, 1
          %s528 = smul.addr %s527, 4
          %s529 = smul.addr %s528, 4
          %s530 = scalar_lea.vmem %s4, %s529
        $region44: #{tpu_custom_call.1} parent=23 // pred_fallthru
          _
        // Predicated region
        $region45: #{tpu_custom_call.1} parent=23 // pred_check
          %p531 = pneg %p187
        $region46: #{tpu_custom_call.1} parent=23 // pred_check_branch
          %533 = sbr.rel (%p531) target = $region48
        $region47: #{tpu_custom_call.1} parent=23 // pred_region
          %p534 = scmp.lt.s32.totalorder %s33, 1
          %s535 = scalar_select %p534, %s33, 1
          %s536 = scalar_lea.vmem %s5, %s535
        $region48: #{tpu_custom_call.1} parent=23 // pred_fallthru
          _
        // Predicated region
        $region49: #{tpu_custom_call.1} parent=23 // pred_check
          %p537 = pneg %p213
        $region50: #{tpu_custom_call.1} parent=23 // pred_check_branch
          %539 = sbr.rel (%p537) target = $region52
        $region51: #{tpu_custom_call.1} parent=23 // pred_region
          %p540 = scmp.lt.s32.totalorder %s33, 1
          %s541 = scalar_select %p540, %s33, 1
          %s542 = scalar_lea.vmem %s6, %s541
        $region52: #{tpu_custom_call.1} parent=23 // pred_fallthru
          _
        // Predicated region
        $region53: #{tpu_custom_call.1} parent=23 // pred_check
          %p543 = pneg %p239
        $region54: #{tpu_custom_call.1} parent=23 // pred_check_branch
          %545 = sbr.rel (%p543) target = $region56
        $region55: #{tpu_custom_call.1} parent=23 // pred_region
          %p546 = scmp.lt.s32.totalorder %s33, 1
          %s547 = scalar_select %p546, %s33, 1
          %s548 = scalar_lea.vmem %s7, %s547
        $region56: #{tpu_custom_call.1} parent=23 // pred_fallthru
          _
        // Predicated region
        $region57: #{tpu_custom_call.1} parent=23 // pred_check
          %p549 = pneg %p265
        $region58: #{tpu_custom_call.1} parent=23 // pred_check_branch
          %551 = sbr.rel (%p549) target = $region60
        $region59: #{tpu_custom_call.1} parent=23 // pred_region
          %p552 = scmp.lt.s32.totalorder %s33, 1
          %s553 = scalar_select %p552, %s33, 1
          %s554 = scalar_lea.vmem %s8, %s553
        $region60: #{tpu_custom_call.1} parent=23 // pred_fallthru
          _
        // Predicated region
        $region61: #{tpu_custom_call.1} parent=23 // pred_check
          %p555 = pneg %p291
        $region62: #{tpu_custom_call.1} parent=23 // pred_check_branch
          %557 = sbr.rel (%p555) target = $region64
        $region63: #{tpu_custom_call.1} parent=23 // pred_region
          %p558 = scmp.lt.s32.totalorder %s33, 1
          %s559 = scalar_select %p558, %s33, 1
          %s560 = scalar_lea.vmem %s9, %s559
        $region64: #{tpu_custom_call.1} parent=23 // pred_fallthru
          _
        // Predicated region
        $region65: #{tpu_custom_call.1} parent=23 // pred_check
          %p561 = pneg %p317
        $region66: #{tpu_custom_call.1} parent=23 // pred_check_branch
          %563 = sbr.rel (%p561) target = $region68
        $region67: #{tpu_custom_call.1} parent=23 // pred_region
          %p564 = scmp.lt.s32.totalorder %s33, 1
          %s565 = scalar_select %p564, %s33, 1
          %s566 = smul.addr %s565, 4
          %s567 = smul.addr %s566, 4
          %s568 = scalar_lea.vmem %s10, %s567
        $region68: #{tpu_custom_call.1} parent=23 // pred_fallthru
          _
        // Predicated region
        $region69: #{tpu_custom_call.1} parent=23 // pred_check
          %p569 = pneg %p343
        $region70: #{tpu_custom_call.1} parent=23 // pred_check_branch
          %571 = sbr.rel (%p569) target = $region72
        $region71: #{tpu_custom_call.1} parent=23 // pred_region
          %p572 = scmp.lt.s32.totalorder %s33, 1
          %s573 = scalar_select %p572, %s33, 1
          %s574 = scalar_lea.vmem %s11, %s573
        $region72: #{tpu_custom_call.1} parent=23 // pred_fallthru
          _
        // Predicated region
        $region73: #{tpu_custom_call.1} parent=23 // pred_check
          %p575 = pneg %p369
        $region74: #{tpu_custom_call.1} parent=23 // pred_check_branch
          %577 = sbr.rel (%p575) target = $region76
        $region75: #{tpu_custom_call.1} parent=23 // pred_region
          %p578 = scmp.lt.s32.totalorder %s33, 1
          %s579 = scalar_select %p578, %s33, 1
          %s580 = smul.addr %s579, 16
          %s581 = smul.addr %s580, 4
          %s582 = scalar_lea.vmem %s12, %s581
        $region76: #{tpu_custom_call.1} parent=23 // pred_fallthru
          _
        // Predicated region
        $region77: #{tpu_custom_call.1} parent=23 // pred_check
          %p583 = pneg %p395
        $region78: #{tpu_custom_call.1} parent=23 // pred_check_branch
          %585 = sbr.rel (%p583) target = $region80
        $region79: #{tpu_custom_call.1} parent=23 // pred_region
          %p586 = scmp.lt.s32.totalorder %s33, 1
          %s587 = scalar_select %p586, %s33, 1
          %s588 = scalar_lea.vmem %s13, %s587
        $region80: #{tpu_custom_call.1} parent=23 // pred_fallthru
          _
      $region24: #{tpu_custom_call.1} parent=5 // pred_fallthru
        _
      %p589 = scmp.le.s32.totalorder 1, %s25
      %p590 = scmp.lt.s32.totalorder %s25, 5
      %p591 = pnand %p589, %p590
      %p592 = pneg %p591
      // Predicated region
      $region81: #{tpu_custom_call.1} parent=5 // pred_check
        _
      $region82: #{tpu_custom_call.1} parent=5 // pred_check_branch
        %594 = sbr.rel (%p591) target = $region84
      $region83: #{tpu_custom_call.1} parent=5 // pred_region
        %s595 = ssub.s32 %s25, 1
        %p596 = scmp.lt.s32.totalorder %s34, 1
        %s597 = scalar_select %p596, %s34, 1
        %s598 = smul.addr %s597, 8
        %s599 = scalar_lea.vmem %s0, %s598
        %p600 = pneg %p63
        %p601 = pneg %p60
        %p602 = scmp.lt.s32.totalorder %s34, 1
        %s603 = scalar_select %p602, %s34, 1
        %s604 = scalar_lea.vmem %s1, %s603
        %p605 = pneg %p89
        %p606 = pneg %p86
        %p607 = scmp.lt.s32.totalorder %s35, 1
        %s608 = scalar_select %p607, %s35, 1
        %s609 = smul.addr %s608, 4
        %s610 = smul.addr %s609, 4
        %s611 = scalar_lea.vmem %s2, %s610
        %p612 = pneg %p115
        %p613 = pneg %p112
        %p614 = scmp.lt.s32.totalorder %s35, 1
        %s615 = scalar_select %p614, %s35, 1
        %s616 = scalar_lea.vmem %s3, %s615
        %p617 = pneg %p141
        %p618 = pneg %p138
        %p619 = scmp.lt.s32.totalorder %s35, 1
        %s620 = scalar_select %p619, %s35, 1
        %s621 = smul.addr %s620, 4
        %s622 = smul.addr %s621, 4
        %s623 = scalar_lea.vmem %s4, %s622
        %p624 = pneg %p167
        %p625 = pneg %p164
        %p626 = scmp.lt.s32.totalorder %s35, 1
        %s627 = scalar_select %p626, %s35, 1
        %s628 = scalar_lea.vmem %s5, %s627
        %p629 = pneg %p193
        %p630 = pneg %p190
        %p631 = scmp.lt.s32.totalorder %s35, 1
        %s632 = scalar_select %p631, %s35, 1
        %s633 = scalar_lea.vmem %s6, %s632
        %p634 = pneg %p219
        %p635 = pneg %p216
        %p636 = scmp.lt.s32.totalorder %s35, 1
        %s637 = scalar_select %p636, %s35, 1
        %s638 = scalar_lea.vmem %s7, %s637
        %p639 = pneg %p245
        %p640 = pneg %p242
        %p641 = scmp.lt.s32.totalorder %s35, 1
        %s642 = scalar_select %p641, %s35, 1
        %s643 = scalar_lea.vmem %s8, %s642
        %p644 = pneg %p271
        %p645 = pneg %p268
        %p646 = scmp.lt.s32.totalorder %s35, 1
        %s647 = scalar_select %p646, %s35, 1
        %s648 = scalar_lea.vmem %s9, %s647
        %p649 = pneg %p297
        %p650 = pneg %p294
        %p651 = scmp.lt.s32.totalorder %s35, 1
        %s652 = scalar_select %p651, %s35, 1
        %s653 = smul.addr %s652, 4
        %s654 = smul.addr %s653, 4
        %s655 = scalar_lea.vmem %s10, %s654
        %p656 = pneg %p323
        %p657 = pneg %p320
        %p658 = scmp.lt.s32.totalorder %s35, 1
        %s659 = scalar_select %p658, %s35, 1
        %s660 = scalar_lea.vmem %s11, %s659
        %p661 = pneg %p349
        %p662 = pneg %p346
        %p663 = scmp.lt.s32.totalorder %s35, 1
        %s664 = scalar_select %p663, %s35, 1
        %s665 = smul.addr %s664, 16
        %s666 = smul.addr %s665, 4
        %s667 = scalar_lea.vmem %s12, %s666
        %p668 = pneg %p375
        %p669 = pneg %p372
        %p670 = scmp.lt.s32.totalorder %s35, 1
        %s671 = scalar_select %p670, %s35, 1
        %s672 = scalar_lea.vmem %s13, %s671
        %p673 = pneg %p401
        %p674 = pneg %p398
        %p675 = pneg %p422
        %p676 = pneg %p419
        %p677 = pneg %p443
        %p678 = pneg %p440
        %p679 = pneg %p471
        %p680 = pneg %p468
        %s681 = sand.u32 %s458, 1
        %s682 = scalar_lea.sflag [#allocation5], %s681
        %s683 = sand.u32 %s458, 1
        %s684 = smul.addr %s683, 8
        %s685 = scalar_lea.vmem [#allocation4], %s684
        %p686 = scmp.lt.s32.totalorder %s34, 1
        %s687 = scalar_select %p686, %s34, 1
        %s688 = smul.addr %s687, 8
        %s689 = scalar_lea.vmem %s0, %s688
        %p690 = scmp.lt.s32.totalorder %s34, 1
        %s691 = scalar_select %p690, %s34, 1
        %s692 = scalar_lea.vmem %s1, %s691
        %p693 = scmp.lt.s32.totalorder %s35, 1
        %s694 = scalar_select %p693, %s35, 1
        %s695 = smul.addr %s694, 4
        %s696 = smul.addr %s695, 4
        %s697 = scalar_lea.vmem %s2, %s696
        %p698 = scmp.lt.s32.totalorder %s35, 1
        %s699 = scalar_select %p698, %s35, 1
        %s700 = scalar_lea.vmem %s3, %s699
        %p701 = scmp.lt.s32.totalorder %s35, 1
        %s702 = scalar_select %p701, %s35, 1
        %s703 = smul.addr %s702, 4
        %s704 = smul.addr %s703, 4
        %s705 = scalar_lea.vmem %s4, %s704
        %p706 = scmp.lt.s32.totalorder %s35, 1
        %s707 = scalar_select %p706, %s35, 1
        %s708 = scalar_lea.vmem %s5, %s707
        %p709 = scmp.lt.s32.totalorder %s35, 1
        %s710 = scalar_select %p709, %s35, 1
        %s711 = scalar_lea.vmem %s6, %s710
        %p712 = scmp.lt.s32.totalorder %s35, 1
        %s713 = scalar_select %p712, %s35, 1
        %s714 = scalar_lea.vmem %s7, %s713
        %p715 = scmp.lt.s32.totalorder %s35, 1
        %s716 = scalar_select %p715, %s35, 1
        %s717 = scalar_lea.vmem %s8, %s716
        %p718 = scmp.lt.s32.totalorder %s35, 1
        %s719 = scalar_select %p718, %s35, 1
        %s720 = scalar_lea.vmem %s9, %s719
        %p721 = scmp.lt.s32.totalorder %s35, 1
        %s722 = scalar_select %p721, %s35, 1
        %s723 = smul.addr %s722, 4
        %s724 = smul.addr %s723, 4
        %s725 = scalar_lea.vmem %s10, %s724
        %p726 = scmp.lt.s32.totalorder %s35, 1
        %s727 = scalar_select %p726, %s35, 1
        %s728 = scalar_lea.vmem %s11, %s727
        %p729 = scmp.lt.s32.totalorder %s35, 1
        %s730 = scalar_select %p729, %s35, 1
        %s731 = smul.addr %s730, 16
        %s732 = smul.addr %s731, 4
        %s733 = scalar_lea.vmem %s12, %s732
        %p734 = scmp.lt.s32.totalorder %s35, 1
        %s735 = scalar_select %p734, %s35, 1
        %s736 = scalar_lea.vmem %s13, %s735
        %p738 = scmp.eq.s32.totalorder %s35, 0
        // Predicated region
        $region85: #{tpu_custom_call.1} parent=83 // pred_check
          %p739 = pneg %p738
        $region86: #{tpu_custom_call.1} parent=83 // pred_check_branch
          %741 = sbr.rel (%p739) target = $region88
        $region87: #{tpu_custom_call.1} parent=83 // pred_region
          %v742 = vld [vmem:[%s689] sm:$0xff]
          %vm743 = vcmask 261120
          %744 = vst.msk [vmem:[#allocation2] sm:$0xff] %vm743, %v742
        $region88: #{tpu_custom_call.1} parent=83 // pred_fallthru
          _
        %v745 = vld [vmem:[#allocation2] sm:$0xff]
        %v746 = vld [vmem:[%s711] sm:$0x1]
        %v747 = vld [vmem:[%s714] sm:$0x1]
        %v748 = vld [vmem:[%s717] sm:$0x1]
        %v749 = vld [vmem:[%s720] sm:$0x1]
        %v750 = vld [vmem:[%s692] sm:$0x1]
        %vm751 = vcmask 261120
        %v752 = vsel %vm751, %v745, 0.0
        %753 = vadd.xlane.f32.xlu0 %v752
        %v754 = vpop.xlane.xlu0 %753
        %v755 = vrcp.pop 32.0
        %v756 = vmul.f32 %v754, %v755
        %v757 = vsub.f32 %v745, %v756
        %v758 = vmul.f32 %v757, %v757
        %v759 = vsel %vm751, %v758, 0.0
        %760 = vadd.xlane.f32.xlu0 %v759
        %v761 = vpop.xlane.xlu0 %760
        %v762 = vmul.f32 %v761, %v755
        %v763 = vadd.f32 %v762, 1e-12
        %v764 = vrsqrt.pop %v763
        %v765 = vmul.f32 %v757, %v764
        %v767 = vlaneseq
        %v768 = vshrl.u32 %v767, 7
        %v769 = vsub.s32 0, %v768
        %v770 = vrot.slane %v746, %v769
        %v772 = vmul.f32 %v765, %v770
        %v774 = vlaneseq
        %v775 = vshrl.u32 %v774, 7
        %v776 = vsub.s32 0, %v775
        %v777 = vrot.slane %v747, %v776
        %v779 = vadd.f32 %v772, %v777
        %v780 = vpack.c.bf16 %v779, %v779
        %v781 = vld [vmem:[%s697] sm:$0xf]
        %v782 = vld [vmem:[%s697 + $0x4] sm:$0xf]
        %v783 = vld [vmem:[%s697 + $0x8] sm:$0xf]
        %v784 = vld [vmem:[%s697 + $0xc] sm:$0xf]
        %v785 = vld [vmem:[%s700] sm:$0x1]
        %v786 = vunpack.c.l.bf16 %v785
        %v787 = vlaneseq
        %v788 = vshrl.u32 %v787, 7
        %v789 = vsub.s32 0, %v788
        %v790 = vrot.slane %v786, %v789
        %v795 = vunpack.c.l.b16 %v781
        %v796 = vunpack.c.l.b16 %v782
        %v797 = vunpack.c.l.b16 %v783
        %v798 = vunpack.c.l.b16 %v784
        %v799 = vpack.c.b16 %v796, %v795
        %v800 = vpack.c.b16 %v798, %v797
        %v804 = vsel %vm751, %v780, 0
        %806 = vmatprep.subr.bf16.mxu0 0
        %807 = vmatpush1.bf16.msra.mxu0 %v799
        %808 = vmatprep.subr.bf16.mxu0 0
        %809 = vmatpush1.bf16.msra.mxu0 %v800
        %810 = vmatprep.subr.bf16.mxu0 0
        %811 = vmatpush1.bf16.msra.mxu0 0
        %812 = vmatprep.subr.bf16.mxu0 0
        %813 = vmatpush1.bf16.msra.mxu0 0
        %814 = vmatprep.subr.bf16.mxu0 0
        %815 = vmatpush1.bf16.msra.mxu0 0
        %816 = vmatprep.subr.bf16.mxu0 0
        %817 = vmatpush1.bf16.msra.mxu0 0
        %818 = vmatprep.subr.bf16.mxu0 0
        %819 = vmatpush1.bf16.msra.mxu0 0
        %820 = vmatprep.subr.bf16.mxu0 0
        %821 = vmatpush1.bf16.msra.mxu0 0
        %822 = vmatprep.subr.bf16.mxu0 0
        %823 = vmatpush1.bf16.msra.mxu0 0
        %824 = vmatprep.subr.bf16.mxu0 0
        %825 = vmatpush1.bf16.msra.mxu0 0
        %826 = vmatprep.subr.bf16.mxu0 0
        %827 = vmatpush1.bf16.msra.mxu0 0
        %828 = vmatprep.subr.bf16.mxu0 0
        %829 = vmatpush1.bf16.msra.mxu0 0
        %830 = vmatprep.subr.bf16.mxu0 0
        %831 = vmatpush1.bf16.msra.mxu0 0
        %832 = vmatprep.subr.bf16.mxu0 0
        %833 = vmatpush1.bf16.msra.mxu0 0
        %834 = vmatprep.subr.bf16.mxu0 0
        %835 = vmatpush1.bf16.msra.mxu0 0
        %836 = vmatprep.subr.bf16.mxu0 0
        %837 = vmatpush1.bf16.msra.mxu0 0
        %838 = vmatprep.mubr.bf16.mxu0 0
        %839 = vmatmul.mubr.bf16.gmra.mrb[0].mxu0 %v804
        %v840 = vpop.f32.mrb[0].mxu0
        %v841 = vadd.f32 %v790, %v840
        %v842 = vpop.f32.mrb[0].mxu0
        %v843 = vpop.f32.mrb[0].mxu0
        %v844 = vpop.f32.mrb[0].mxu0
        %845 = vdwg.mxu0
        %v846 = vmul.f32 %v841, 0.35355338
        %v847 = vpack.c.bf16 %v846, %v846
        %v848 = vpack.c.bf16 %v841, %v841
        %v850 = vlaneseq
        %v851 = vshrl.u32 %v850, 7
        %v852 = vsub.s32 0, %v851
        %v853 = vrot.slane %v750, %v852
        %856 = vrot.lane.b32.xlu0 %v848, 96
        %v857 = vpop.permute.xlu0 %856
        %vm858 = vcmask 64512
        %v860 = vsel %vm858, %v847, 0
        %v863 = vsel %vm858, %v857, 0
        %865 = vmatprep.subr.bf16.mxu0 0
        %866 = vmatpush1.bf16.xpose.msra.mxu0 %v863
        %867 = vmatprep.subr.bf16.mxu0 0
        %868 = vmatpush1.bf16.xpose.msra.mxu0 0
        %869 = vmatprep.subr.bf16.mxu0 0
        %870 = vmatpush1.bf16.xpose.msra.mxu0 0
        %871 = vmatprep.subr.bf16.mxu0 0
        %872 = vmatpush1.bf16.xpose.msra.mxu0 0
        %873 = vmatprep.subr.bf16.mxu0 0
        %874 = vmatpush1.bf16.xpose.msra.mxu0 0
        %875 = vmatprep.subr.bf16.mxu0 0
        %876 = vmatpush1.bf16.xpose.msra.mxu0 0
        %877 = vmatprep.subr.bf16.mxu0 0
        %878 = vmatpush1.bf16.xpose.msra.mxu0 0
        %879 = vmatprep.subr.bf16.mxu0 0
        %880 = vmatpush1.bf16.xpose.msra.mxu0 0
        %881 = vmatprep.subr.bf16.mxu0 0
        %882 = vmatpush1.bf16.xpose.msra.mxu0 0
        %883 = vmatprep.subr.bf16.mxu0 0
        %884 = vmatpush1.bf16.xpose.msra.mxu0 0
        %885 = vmatprep.subr.bf16.mxu0 0
        %886 = vmatpush1.bf16.xpose.msra.mxu0 0
        %887 = vmatprep.subr.bf16.mxu0 0
        %888 = vmatpush1.bf16.xpose.msra.mxu0 0
        %889 = vmatprep.subr.bf16.mxu0 0
        %890 = vmatpush1.bf16.xpose.msra.mxu0 0
        %891 = vmatprep.subr.bf16.mxu0 0
        %892 = vmatpush1.bf16.xpose.msra.mxu0 0
        %893 = vmatprep.subr.bf16.mxu0 0
        %894 = vmatpush1.bf16.xpose.msra.mxu0 0
        %895 = vmatprep.subr.bf16.mxu0 0
        %896 = vmatpush1.bf16.xpose.msra.mxu0 0
        %897 = vmatprep.mubr.bf16.mxu0 0
        %898 = vmatmul.mubr.bf16.gmra.mrb[0].mxu0 %v860
        %v899 = vpop.f32.mrb[0].mxu0
        %v900 = vadd.f32 %v853, %v899
        %v901 = vpop.f32.mrb[0].mxu0
        %v902 = vpop.f32.mrb[0].mxu0
        %v903 = vpop.f32.mrb[0].mxu0
        %904 = vdwg.mxu0
        %v905 = vsel %vm858, %v900, -inf
        %906 = vmax.xlane.f32.xlu0 %v905
        %v907 = vpop.xlane.xlu0 %906
        %v908 = vsub.f32 %v900, %v907
        %v909 = vmul.f32 %v908, 1.442695
        %v910 = vpow.pop %v909
        %v911 = vsel %vm858, %v910, 0.0
        %912 = vadd.xlane.f32.xlu0 %v911
        %v913 = vpop.xlane.xlu0 %912
        %v914 = vrcp.pop %v913
        %v915 = vpack.c.bf16 %v910, %v910
        %916 = vrot.lane.b32.xlu0 %v848, 64
        %v917 = vpop.permute.xlu0 %916
        %v919 = vsel %vm858, %v915, 0
        %vm921 = vcmask 1043456
        %v923 = vsel %vm921, %v917, 0
        %925 = vmatprep.subr.bf16.mxu0 0
        %926 = vmatpush1.bf16.msra.mxu0 %v923
        %927 = vmatprep.subr.bf16.mxu0 0
        %928 = vmatpush1.bf16.msra.mxu0 0
        %929 = vmatprep.subr.bf16.mxu0 0
        %930 = vmatpush1.bf16.msra.mxu0 0
        %931 = vmatprep.subr.bf16.mxu0 0
        %932 = vmatpush1.bf16.msra.mxu0 0
        %933 = vmatprep.subr.bf16.mxu0 0
        %934 = vmatpush1.bf16.msra.mxu0 0
        %935 = vmatprep.subr.bf16.mxu0 0
        %936 = vmatpush1.bf16.msra.mxu0 0
        %937 = vmatprep.subr.bf16.mxu0 0
        %938 = vmatpush1.bf16.msra.mxu0 0
        %939 = vmatprep.subr.bf16.mxu0 0
        %940 = vmatpush1.bf16.msra.mxu0 0
        %941 = vmatprep.subr.bf16.mxu0 0
        %942 = vmatpush1.bf16.msra.mxu0 0
        %943 = vmatprep.subr.bf16.mxu0 0
        %944 = vmatpush1.bf16.msra.mxu0 0
        %945 = vmatprep.subr.bf16.mxu0 0
        %946 = vmatpush1.bf16.msra.mxu0 0
        %947 = vmatprep.subr.bf16.mxu0 0
        %948 = vmatpush1.bf16.msra.mxu0 0
        %949 = vmatprep.subr.bf16.mxu0 0
        %950 = vmatpush1.bf16.msra.mxu0 0
        %951 = vmatprep.subr.bf16.mxu0 0
        %952 = vmatpush1.bf16.msra.mxu0 0
        %953 = vmatprep.subr.bf16.mxu0 0
        %954 = vmatpush1.bf16.msra.mxu0 0
        %955 = vmatprep.subr.bf16.mxu0 0
        %956 = vmatpush1.bf16.msra.mxu0 0
        %957 = vmatprep.mubr.bf16.mxu0 0
        %958 = vmatmul.mubr.bf16.gmra.mrb[0].mxu0 %v919
        %v959 = vpop.f32.mrb[0].mxu0
        %v960 = vadd.f32 0.0, %v959
        %v961 = vpop.f32.mrb[0].mxu0
        %v962 = vpop.f32.mrb[0].mxu0
        %v963 = vpop.f32.mrb[0].mxu0
        %964 = vdwg.mxu0
        %v965 = vmul.f32 %v960, %v914
        %v966 = vpack.c.bf16 %v965, %v965
        %vm967 = vcmask 60416
        %968 = vst.msk [vmem:[#allocation3] sm:$0xf] %vm967, %v966
        %970 = vrot.lane.b32.xlu0 %v847, 120
        %v971 = vpop.permute.xlu0 %970
        %972 = vrot.lane.b32.xlu0 %v848, 88
        %v973 = vpop.permute.xlu0 %972
        %v975 = vsel %vm858, %v971, 0
        %v978 = vsel %vm858, %v973, 0
        %980 = vmatprep.subr.bf16.mxu0 0
        %981 = vmatpush1.bf16.xpose.msra.mxu0 %v978
        %982 = vmatprep.subr.bf16.mxu0 0
        %983 = vmatpush1.bf16.xpose.msra.mxu0 0
        %984 = vmatprep.subr.bf16.mxu0 0
        %985 = vmatpush1.bf16.xpose.msra.mxu0 0
        %986 = vmatprep.subr.bf16.mxu0 0
        %987 = vmatpush1.bf16.xpose.msra.mxu0 0
        %988 = vmatprep.subr.bf16.mxu0 0
        %989 = vmatpush1.bf16.xpose.msra.mxu0 0
        %990 = vmatprep.subr.bf16.mxu0 0
        %991 = vmatpush1.bf16.xpose.msra.mxu0 0
        %992 = vmatprep.subr.bf16.mxu0 0
        %993 = vmatpush1.bf16.xpose.msra.mxu0 0
        %994 = vmatprep.subr.bf16.mxu0 0
        %995 = vmatpush1.bf16.xpose.msra.mxu0 0
        %996 = vmatprep.subr.bf16.mxu0 0
        %997 = vmatpush1.bf16.xpose.msra.mxu0 0
        %998 = vmatprep.subr.bf16.mxu0 0
        %999 = vmatpush1.bf16.xpose.msra.mxu0 0
        %1000 = vmatprep.subr.bf16.mxu0 0
        %1001 = vmatpush1.bf16.xpose.msra.mxu0 0
        %1002 = vmatprep.subr.bf16.mxu0 0
        %1003 = vmatpush1.bf16.xpose.msra.mxu0 0
        %1004 = vmatprep.subr.bf16.mxu0 0
        %1005 = vmatpush1.bf16.xpose.msra.mxu0 0
        %1006 = vmatprep.subr.bf16.mxu0 0
        %1007 = vmatpush1.bf16.xpose.msra.mxu0 0
        %1008 = vmatprep.subr.bf16.mxu0 0
        %1009 = vmatpush1.bf16.xpose.msra.mxu0 0
        %1010 = vmatprep.subr.bf16.mxu0 0
        %1011 = vmatpush1.bf16.xpose.msra.mxu0 0
        %1012 = vmatprep.mubr.bf16.mxu0 0
        %1013 = vmatmul.mubr.bf16.gmra.mrb[0].mxu0 %v975
        %v1014 = vpop.f32.mrb[0].mxu0
        %v1015 = vadd.f32 %v853, %v1014
        %v1016 = vpop.f32.mrb[0].mxu0
        %v1017 = vpop.f32.mrb[0].mxu0
        %v1018 = vpop.f32.mrb[0].mxu0
        %1019 = vdwg.mxu0
        %v1020 = vsel %vm858, %v1015, -inf
        %1021 = vmax.xlane.f32.xlu0 %v1020
        %v1022 = vpop.xlane.xlu0 %1021
        %v1023 = vsub.f32 %v1015, %v1022
        %v1024 = vmul.f32 %v1023, 1.442695
        %v1025 = vpow.pop %v1024
        %v1026 = vsel %vm858, %v1025, 0.0
        %1027 = vadd.xlane.f32.xlu0 %v1026
        %v1028 = vpop.xlane.xlu0 %1027
        %v1029 = vrcp.pop %v1028
        %v1030 = vpack.c.bf16 %v1025, %v1025
        %1031 = vrot.lane.b32.xlu0 %v848, 56
        %v1032 = vpop.permute.xlu0 %1031
        %v1034 = vsel %vm858, %v1030, 0
        %v1037 = vsel %vm921, %v1032, 0
        %1039 = vmatprep.subr.bf16.mxu0 0
        %1040 = vmatpush1.bf16.msra.mxu0 %v1037
        %1041 = vmatprep.subr.bf16.mxu0 0
        %1042 = vmatpush1.bf16.msra.mxu0 0
        %1043 = vmatprep.subr.bf16.mxu0 0
        %1044 = vmatpush1.bf16.msra.mxu0 0
        %1045 = vmatprep.subr.bf16.mxu0 0
        %1046 = vmatpush1.bf16.msra.mxu0 0
        %1047 = vmatprep.subr.bf16.mxu0 0
        %1048 = vmatpush1.bf16.msra.mxu0 0
        %1049 = vmatprep.subr.bf16.mxu0 0
        %1050 = vmatpush1.bf16.msra.mxu0 0
        %1051 = vmatprep.subr.bf16.mxu0 0
        %1052 = vmatpush1.bf16.msra.mxu0 0
        %1053 = vmatprep.subr.bf16.mxu0 0
        %1054 = vmatpush1.bf16.msra.mxu0 0
        %1055 = vmatprep.subr.bf16.mxu0 0
        %1056 = vmatpush1.bf16.msra.mxu0 0
        %1057 = vmatprep.subr.bf16.mxu0 0
        %1058 = vmatpush1.bf16.msra.mxu0 0
        %1059 = vmatprep.subr.bf16.mxu0 0
        %1060 = vmatpush1.bf16.msra.mxu0 0
        %1061 = vmatprep.subr.bf16.mxu0 0
        %1062 = vmatpush1.bf16.msra.mxu0 0
        %1063 = vmatprep.subr.bf16.mxu0 0
        %1064 = vmatpush1.bf16.msra.mxu0 0
        %1065 = vmatprep.subr.bf16.mxu0 0
        %1066 = vmatpush1.bf16.msra.mxu0 0
        %1067 = vmatprep.subr.bf16.mxu0 0
        %1068 = vmatpush1.bf16.msra.mxu0 0
        %1069 = vmatprep.subr.bf16.mxu0 0
        %1070 = vmatpush1.bf16.msra.mxu0 0
        %1071 = vmatprep.mubr.bf16.mxu0 0
        %1072 = vmatmul.mubr.bf16.gmra.mrb[0].mxu0 %v1034
        %v1073 = vpop.f32.mrb[0].mxu0
        %v1074 = vadd.f32 0.0, %v1073
        %v1075 = vpop.f32.mrb[0].mxu0
        %v1076 = vpop.f32.mrb[0].mxu0
        %v1077 = vpop.f32.mrb[0].mxu0
        %1078 = vdwg.mxu0
        %v1079 = vmul.f32 %v1074, %v1029
        %v1080 = vpack.c.bf16 %v1079, %v1079
        %v1082 = vunpack.c.l.b16 %v1080
        %v1083 = vpack.c.b16 %v1082, %v1082
        %1084 = vrot.lane.b32.xlu0 %v1083, 8
        %v1085 = vpop.permute.xlu0 %1084
        %vm1087 = vcmask 126016
        %1088 = vst.msk [vmem:[#allocation3] sm:$0xf] %vm1087, %v1085
        %1089 = vrot.lane.b32.xlu0 %v847, 112
        %v1090 = vpop.permute.xlu0 %1089
        %1091 = vrot.lane.b32.xlu0 %v848, 80
        %v1092 = vpop.permute.xlu0 %1091
        %v1094 = vsel %vm858, %v1090, 0
        %v1097 = vsel %vm858, %v1092, 0
        %1099 = vmatprep.subr.bf16.mxu0 0
        %1100 = vmatpush1.bf16.xpose.msra.mxu0 %v1097
        %1101 = vmatprep.subr.bf16.mxu0 0
        %1102 = vmatpush1.bf16.xpose.msra.mxu0 0
        %1103 = vmatprep.subr.bf16.mxu0 0
        %1104 = vmatpush1.bf16.xpose.msra.mxu0 0
        %1105 = vmatprep.subr.bf16.mxu0 0
        %1106 = vmatpush1.bf16.xpose.msra.mxu0 0
        %1107 = vmatprep.subr.bf16.mxu0 0
        %1108 = vmatpush1.bf16.xpose.msra.mxu0 0
        %1109 = vmatprep.subr.bf16.mxu0 0
        %1110 = vmatpush1.bf16.xpose.msra.mxu0 0
        %1111 = vmatprep.subr.bf16.mxu0 0
        %1112 = vmatpush1.bf16.xpose.msra.mxu0 0
        %1113 = vmatprep.subr.bf16.mxu0 0
        %1114 = vmatpush1.bf16.xpose.msra.mxu0 0
        %1115 = vmatprep.subr.bf16.mxu0 0
        %1116 = vmatpush1.bf16.xpose.msra.mxu0 0
        %1117 = vmatprep.subr.bf16.mxu0 0
        %1118 = vmatpush1.bf16.xpose.msra.mxu0 0
        %1119 = vmatprep.subr.bf16.mxu0 0
        %1120 = vmatpush1.bf16.xpose.msra.mxu0 0
        %1121 = vmatprep.subr.bf16.mxu0 0
        %1122 = vmatpush1.bf16.xpose.msra.mxu0 0
        %1123 = vmatprep.subr.bf16.mxu0 0
        %1124 = vmatpush1.bf16.xpose.msra.mxu0 0
        %1125 = vmatprep.subr.bf16.mxu0 0
        %1126 = vmatpush1.bf16.xpose.msra.mxu0 0
        %1127 = vmatprep.subr.bf16.mxu0 0
        %1128 = vmatpush1.bf16.xpose.msra.mxu0 0
        %1129 = vmatprep.subr.bf16.mxu0 0
        %1130 = vmatpush1.bf16.xpose.msra.mxu0 0
        %1131 = vmatprep.mubr.bf16.mxu0 0
        %1132 = vmatmul.mubr.bf16.gmra.mrb[0].mxu0 %v1094
        %v1133 = vpop.f32.mrb[0].mxu0
        %v1134 = vadd.f32 %v853, %v1133
        %v1135 = vpop.f32.mrb[0].mxu0
        %v1136 = vpop.f32.mrb[0].mxu0
        %v1137 = vpop.f32.mrb[0].mxu0
        %1138 = vdwg.mxu0
        %v1139 = vsel %vm858, %v1134, -inf
        %1140 = vmax.xlane.f32.xlu0 %v1139
        %v1141 = vpop.xlane.xlu0 %1140
        %v1142 = vsub.f32 %v1134, %v1141
        %v1143 = vmul.f32 %v1142, 1.442695
        %v1144 = vpow.pop %v1143
        %v1145 = vsel %vm858, %v1144, 0.0
        %1146 = vadd.xlane.f32.xlu0 %v1145
        %v1147 = vpop.xlane.xlu0 %1146
        %v1148 = vrcp.pop %v1147
        %v1149 = vpack.c.bf16 %v1144, %v1144
        %1150 = vrot.lane.b32.xlu0 %v848, 48
        %v1151 = vpop.permute.xlu0 %1150
        %v1153 = vsel %vm858, %v1149, 0
        %v1156 = vsel %vm921, %v1151, 0
        %1158 = vmatprep.subr.bf16.mxu0 0
        %1159 = vmatpush1.bf16.msra.mxu0 %v1156
        %1160 = vmatprep.subr.bf16.mxu0 0
        %1161 = vmatpush1.bf16.msra.mxu0 0
        %1162 = vmatprep.subr.bf16.mxu0 0
        %1163 = vmatpush1.bf16.msra.mxu0 0
        %1164 = vmatprep.subr.bf16.mxu0 0
        %1165 = vmatpush1.bf16.msra.mxu0 0
        %1166 = vmatprep.subr.bf16.mxu0 0
        %1167 = vmatpush1.bf16.msra.mxu0 0
        %1168 = vmatprep.subr.bf16.mxu0 0
        %1169 = vmatpush1.bf16.msra.mxu0 0
        %1170 = vmatprep.subr.bf16.mxu0 0
        %1171 = vmatpush1.bf16.msra.mxu0 0
        %1172 = vmatprep.subr.bf16.mxu0 0
        %1173 = vmatpush1.bf16.msra.mxu0 0
        %1174 = vmatprep.subr.bf16.mxu0 0
        %1175 = vmatpush1.bf16.msra.mxu0 0
        %1176 = vmatprep.subr.bf16.mxu0 0
        %1177 = vmatpush1.bf16.msra.mxu0 0
        %1178 = vmatprep.subr.bf16.mxu0 0
        %1179 = vmatpush1.bf16.msra.mxu0 0
        %1180 = vmatprep.subr.bf16.mxu0 0
        %1181 = vmatpush1.bf16.msra.mxu0 0
        %1182 = vmatprep.subr.bf16.mxu0 0
        %1183 = vmatpush1.bf16.msra.mxu0 0
        %1184 = vmatprep.subr.bf16.mxu0 0
        %1185 = vmatpush1.bf16.msra.mxu0 0
        %1186 = vmatprep.subr.bf16.mxu0 0
        %1187 = vmatpush1.bf16.msra.mxu0 0
        %1188 = vmatprep.subr.bf16.mxu0 0
        %1189 = vmatpush1.bf16.msra.mxu0 0
        %1190 = vmatprep.mubr.bf16.mxu0 0
        %1191 = vmatmul.mubr.bf16.gmra.mrb[0].mxu0 %v1153
        %v1192 = vpop.f32.mrb[0].mxu0
        %v1193 = vadd.f32 0.0, %v1192
        %v1194 = vpop.f32.mrb[0].mxu0
        %v1195 = vpop.f32.mrb[0].mxu0
        %v1196 = vpop.f32.mrb[0].mxu0
        %1197 = vdwg.mxu0
        %v1198 = vmul.f32 %v1193, %v1148
        %v1199 = vpack.c.bf16 %v1198, %v1198
        %v1201 = vunpack.c.l.b16 %v1199
        %v1202 = vpack.c.b16 %v1201, %v1201
        %1203 = vrot.lane.b32.xlu0 %v1202, 16
        %v1204 = vpop.permute.xlu0 %1203
        %vm1206 = vcmask 191616
        %1207 = vst.msk [vmem:[#allocation3] sm:$0xf] %vm1206, %v1204
        %1208 = vrot.lane.b32.xlu0 %v847, 104
        %v1209 = vpop.permute.xlu0 %1208
        %1210 = vrot.lane.b32.xlu0 %v848, 72
        %v1211 = vpop.permute.xlu0 %1210
        %v1213 = vsel %vm858, %v1209, 0
        %v1216 = vsel %vm858, %v1211, 0
        %1218 = vmatprep.subr.bf16.mxu0 0
        %1219 = vmatpush1.bf16.xpose.msra.mxu0 %v1216
        %1220 = vmatprep.subr.bf16.mxu0 0
        %1221 = vmatpush1.bf16.xpose.msra.mxu0 0
        %1222 = vmatprep.subr.bf16.mxu0 0
        %1223 = vmatpush1.bf16.xpose.msra.mxu0 0
        %1224 = vmatprep.subr.bf16.mxu0 0
        %1225 = vmatpush1.bf16.xpose.msra.mxu0 0
        %1226 = vmatprep.subr.bf16.mxu0 0
        %1227 = vmatpush1.bf16.xpose.msra.mxu0 0
        %1228 = vmatprep.subr.bf16.mxu0 0
        %1229 = vmatpush1.bf16.xpose.msra.mxu0 0
        %1230 = vmatprep.subr.bf16.mxu0 0
        %1231 = vmatpush1.bf16.xpose.msra.mxu0 0
        %1232 = vmatprep.subr.bf16.mxu0 0
        %1233 = vmatpush1.bf16.xpose.msra.mxu0 0
        %1234 = vmatprep.subr.bf16.mxu0 0
        %1235 = vmatpush1.bf16.xpose.msra.mxu0 0
        %1236 = vmatprep.subr.bf16.mxu0 0
        %1237 = vmatpush1.bf16.xpose.msra.mxu0 0
        %1238 = vmatprep.subr.bf16.mxu0 0
        %1239 = vmatpush1.bf16.xpose.msra.mxu0 0
        %1240 = vmatprep.subr.bf16.mxu0 0
        %1241 = vmatpush1.bf16.xpose.msra.mxu0 0
        %1242 = vmatprep.subr.bf16.mxu0 0
        %1243 = vmatpush1.bf16.xpose.msra.mxu0 0
        %1244 = vmatprep.subr.bf16.mxu0 0
        %1245 = vmatpush1.bf16.xpose.msra.mxu0 0
        %1246 = vmatprep.subr.bf16.mxu0 0
        %1247 = vmatpush1.bf16.xpose.msra.mxu0 0
        %1248 = vmatprep.subr.bf16.mxu0 0
        %1249 = vmatpush1.bf16.xpose.msra.mxu0 0
        %1250 = vmatprep.mubr.bf16.mxu0 0
        %1251 = vmatmul.mubr.bf16.gmra.mrb[0].mxu0 %v1213
        %v1252 = vpop.f32.mrb[0].mxu0
        %v1253 = vadd.f32 %v853, %v1252
        %v1254 = vpop.f32.mrb[0].mxu0
        %v1255 = vpop.f32.mrb[0].mxu0
        %v1256 = vpop.f32.mrb[0].mxu0
        %1257 = vdwg.mxu0
        %v1258 = vsel %vm858, %v1253, -inf
        %1259 = vmax.xlane.f32.xlu0 %v1258
        %v1260 = vpop.xlane.xlu0 %1259
        %v1261 = vsub.f32 %v1253, %v1260
        %v1262 = vmul.f32 %v1261, 1.442695
        %v1263 = vpow.pop %v1262
        %v1264 = vsel %vm858, %v1263, 0.0
        %1265 = vadd.xlane.f32.xlu0 %v1264
        %v1266 = vpop.xlane.xlu0 %1265
        %v1267 = vrcp.pop %v1266
        %v1268 = vpack.c.bf16 %v1263, %v1263
        %1269 = vrot.lane.b32.xlu0 %v848, 40
        %v1270 = vpop.permute.xlu0 %1269
        %v1272 = vsel %vm858, %v1268, 0
        %v1275 = vsel %vm921, %v1270, 0
        %1277 = vmatprep.subr.bf16.mxu0 0
        %1278 = vmatpush1.bf16.msra.mxu0 %v1275
        %1279 = vmatprep.subr.bf16.mxu0 0
        %1280 = vmatpush1.bf16.msra.mxu0 0
        %1281 = vmatprep.subr.bf16.mxu0 0
        %1282 = vmatpush1.bf16.msra.mxu0 0
        %1283 = vmatprep.subr.bf16.mxu0 0
        %1284 = vmatpush1.bf16.msra.mxu0 0
        %1285 = vmatprep.subr.bf16.mxu0 0
        %1286 = vmatpush1.bf16.msra.mxu0 0
        %1287 = vmatprep.subr.bf16.mxu0 0
        %1288 = vmatpush1.bf16.msra.mxu0 0
        %1289 = vmatprep.subr.bf16.mxu0 0
        %1290 = vmatpush1.bf16.msra.mxu0 0
        %1291 = vmatprep.subr.bf16.mxu0 0
        %1292 = vmatpush1.bf16.msra.mxu0 0
        %1293 = vmatprep.subr.bf16.mxu0 0
        %1294 = vmatpush1.bf16.msra.mxu0 0
        %1295 = vmatprep.subr.bf16.mxu0 0
        %1296 = vmatpush1.bf16.msra.mxu0 0
        %1297 = vmatprep.subr.bf16.mxu0 0
        %1298 = vmatpush1.bf16.msra.mxu0 0
        %1299 = vmatprep.subr.bf16.mxu0 0
        %1300 = vmatpush1.bf16.msra.mxu0 0
        %1301 = vmatprep.subr.bf16.mxu0 0
        %1302 = vmatpush1.bf16.msra.mxu0 0
        %1303 = vmatprep.subr.bf16.mxu0 0
        %1304 = vmatpush1.bf16.msra.mxu0 0
        %1305 = vmatprep.subr.bf16.mxu0 0
        %1306 = vmatpush1.bf16.msra.mxu0 0
        %1307 = vmatprep.subr.bf16.mxu0 0
        %1308 = vmatpush1.bf16.msra.mxu0 0
        %1309 = vmatprep.mubr.bf16.mxu0 0
        %1310 = vmatmul.mubr.bf16.gmra.mrb[0].mxu0 %v1272
        %v1311 = vpop.f32.mrb[0].mxu0
        %v1312 = vadd.f32 0.0, %v1311
        %v1313 = vpop.f32.mrb[0].mxu0
        %v1314 = vpop.f32.mrb[0].mxu0
        %v1315 = vpop.f32.mrb[0].mxu0
        %1316 = vdwg.mxu0
        %v1317 = vmul.f32 %v1312, %v1267
        %v1318 = vpack.c.bf16 %v1317, %v1317
        %v1320 = vunpack.c.l.b16 %v1318
        %v1321 = vpack.c.b16 %v1320, %v1320
        %1322 = vrot.lane.b32.xlu0 %v1321, 24
        %v1323 = vpop.permute.xlu0 %1322
        %vm1325 = vcmask 257216
        %1326 = vst.msk [vmem:[#allocation3] sm:$0xf] %vm1325, %v1323
        %v1327 = vld [vmem:[#allocation3] sm:$0xf]
        %v1328 = vld [vmem:[%s705] sm:$0xf]
        %v1329 = vld [vmem:[%s705 + $0x4] sm:$0xf]
        %v1330 = vld [vmem:[%s705 + $0x8] sm:$0xf]
        %v1331 = vld [vmem:[%s705 + $0xc] sm:$0xf]
        %v1332 = vld [vmem:[%s708] sm:$0x1]
        %v1333 = vunpack.c.l.bf16 %v1332
        %v1334 = vlaneseq
        %v1335 = vshrl.u32 %v1334, 7
        %v1336 = vsub.s32 0, %v1335
        %v1337 = vrot.slane %v1333, %v1336
        %v1342 = vunpack.c.l.b16 %v1328
        %v1343 = vunpack.c.l.b16 %v1329
        %v1344 = vunpack.c.l.b16 %v1330
        %v1345 = vunpack.c.l.b16 %v1331
        %v1346 = vpack.c.b16 %v1343, %v1342
        %v1347 = vpack.c.b16 %v1345, %v1344
        %v1351 = vsel %vm751, %v1327, 0
        %1353 = vmatprep.subr.bf16.mxu0 0
        %1354 = vmatpush1.bf16.msra.mxu0 %v1346
        %1355 = vmatprep.subr.bf16.mxu0 0
        %1356 = vmatpush1.bf16.msra.mxu0 %v1347
        %1357 = vmatprep.subr.bf16.mxu0 0
        %1358 = vmatpush1.bf16.msra.mxu0 0
        %1359 = vmatprep.subr.bf16.mxu0 0
        %1360 = vmatpush1.bf16.msra.mxu0 0
        %1361 = vmatprep.subr.bf16.mxu0 0
        %1362 = vmatpush1.bf16.msra.mxu0 0
        %1363 = vmatprep.subr.bf16.mxu0 0
        %1364 = vmatpush1.bf16.msra.mxu0 0
        %1365 = vmatprep.subr.bf16.mxu0 0
        %1366 = vmatpush1.bf16.msra.mxu0 0
        %1367 = vmatprep.subr.bf16.mxu0 0
        %1368 = vmatpush1.bf16.msra.mxu0 0
        %1369 = vmatprep.subr.bf16.mxu0 0
        %1370 = vmatpush1.bf16.msra.mxu0 0
        %1371 = vmatprep.subr.bf16.mxu0 0
        %1372 = vmatpush1.bf16.msra.mxu0 0
        %1373 = vmatprep.subr.bf16.mxu0 0
        %1374 = vmatpush1.bf16.msra.mxu0 0
        %1375 = vmatprep.subr.bf16.mxu0 0
        %1376 = vmatpush1.bf16.msra.mxu0 0
        %1377 = vmatprep.subr.bf16.mxu0 0
        %1378 = vmatpush1.bf16.msra.mxu0 0
        %1379 = vmatprep.subr.bf16.mxu0 0
        %1380 = vmatpush1.bf16.msra.mxu0 0
        %1381 = vmatprep.subr.bf16.mxu0 0
        %1382 = vmatpush1.bf16.msra.mxu0 0
        %1383 = vmatprep.subr.bf16.mxu0 0
        %1384 = vmatpush1.bf16.msra.mxu0 0
        %1385 = vmatprep.mubr.bf16.mxu0 0
        %1386 = vmatmul.mubr.bf16.gmra.mrb[0].mxu0 %v1351
        %v1387 = vpop.f32.mrb[0].mxu0
        %v1388 = vadd.f32 %v1337, %v1387
        %v1389 = vpop.f32.mrb[0].mxu0
        %v1390 = vpop.f32.mrb[0].mxu0
        %v1391 = vpop.f32.mrb[0].mxu0
        %1392 = vdwg.mxu0
        %v1393 = vadd.f32 %v745, %v1388
        %v1394 = vsel %vm751, %v1393, 0.0
        %1395 = vadd.xlane.f32.xlu0 %v1394
        %v1396 = vpop.xlane.xlu0 %1395
        %v1397 = vmul.f32 %v1396, %v755
        %v1398 = vsub.f32 %v1393, %v1397
        %v1399 = vmul.f32 %v1398, %v1398
        %v1400 = vsel %vm751, %v1399, 0.0
        %1401 = vadd.xlane.f32.xlu0 %v1400
        %v1402 = vpop.xlane.xlu0 %1401
        %v1403 = vmul.f32 %v1402, %v755
        %v1404 = vadd.f32 %v1403, 1e-12
        %v1405 = vrsqrt.pop %v1404
        %v1406 = vmul.f32 %v1398, %v1405
        %v1408 = vlaneseq
        %v1409 = vshrl.u32 %v1408, 7
        %v1410 = vsub.s32 0, %v1409
        %v1411 = vrot.slane %v748, %v1410
        %v1413 = vmul.f32 %v1406, %v1411
        %v1415 = vlaneseq
        %v1416 = vshrl.u32 %v1415, 7
        %v1417 = vsub.s32 0, %v1416
        %v1418 = vrot.slane %v749, %v1417
        %v1420 = vadd.f32 %v1413, %v1418
        %v1421 = vpack.c.bf16 %v1420, %v1420
        %v1422 = vld [vmem:[%s725] sm:$0xf]
        %v1423 = vld [vmem:[%s725 + $0x4] sm:$0xf]
        %v1424 = vld [vmem:[%s725 + $0x8] sm:$0xf]
        %v1425 = vld [vmem:[%s725 + $0xc] sm:$0xf]
        %v1426 = vld [vmem:[%s728] sm:$0x1]
        %v1427 = vunpack.c.l.bf16 %v1426
        %v1428 = vlaneseq
        %v1429 = vshrl.u32 %v1428, 7
        %v1430 = vsub.s32 0, %v1429
        %v1431 = vrot.slane %v1427, %v1430
        %v1436 = vunpack.c.l.b16 %v1422
        %v1437 = vunpack.c.l.b16 %v1423
        %v1438 = vunpack.c.l.b16 %v1424
        %v1439 = vunpack.c.l.b16 %v1425
        %v1440 = vpack.c.b16 %v1437, %v1436
        %v1441 = vpack.c.b16 %v1439, %v1438
        %v1445 = vsel %vm751, %v1421, 0
        %1447 = vmatprep.subr.bf16.mxu0 0
        %1448 = vmatpush1.bf16.msra.mxu0 %v1440
        %1449 = vmatprep.subr.bf16.mxu0 0
        %1450 = vmatpush1.bf16.msra.mxu0 %v1441
        %1451 = vmatprep.subr.bf16.mxu0 0
        %1452 = vmatpush1.bf16.msra.mxu0 0
        %1453 = vmatprep.subr.bf16.mxu0 0
        %1454 = vmatpush1.bf16.msra.mxu0 0
        %1455 = vmatprep.subr.bf16.mxu0 0
        %1456 = vmatpush1.bf16.msra.mxu0 0
        %1457 = vmatprep.subr.bf16.mxu0 0
        %1458 = vmatpush1.bf16.msra.mxu0 0
        %1459 = vmatprep.subr.bf16.mxu0 0
        %1460 = vmatpush1.bf16.msra.mxu0 0
        %1461 = vmatprep.subr.bf16.mxu0 0
        %1462 = vmatpush1.bf16.msra.mxu0 0
        %1463 = vmatprep.subr.bf16.mxu0 0
        %1464 = vmatpush1.bf16.msra.mxu0 0
        %1465 = vmatprep.subr.bf16.mxu0 0
        %1466 = vmatpush1.bf16.msra.mxu0 0
        %1467 = vmatprep.subr.bf16.mxu0 0
        %1468 = vmatpush1.bf16.msra.mxu0 0
        %1469 = vmatprep.subr.bf16.mxu0 0
        %1470 = vmatpush1.bf16.msra.mxu0 0
        %1471 = vmatprep.subr.bf16.mxu0 0
        %1472 = vmatpush1.bf16.msra.mxu0 0
        %1473 = vmatprep.subr.bf16.mxu0 0
        %1474 = vmatpush1.bf16.msra.mxu0 0
        %1475 = vmatprep.subr.bf16.mxu0 0
        %1476 = vmatpush1.bf16.msra.mxu0 0
        %1477 = vmatprep.subr.bf16.mxu0 0
        %1478 = vmatpush1.bf16.msra.mxu0 0
        %1479 = vmatprep.mubr.bf16.mxu0 0
        %1480 = vmatmul.mubr.bf16.gmra.mrb[0].mxu0 %v1445
        %v1481 = vpop.f32.mrb[0].mxu0
        %v1482 = vadd.f32 %v1431, %v1481
        %v1483 = vpop.f32.mrb[0].mxu0
        %v1484 = vpop.f32.mrb[0].mxu0
        %v1485 = vpop.f32.mrb[0].mxu0
        %1486 = vdwg.mxu0
        %v1487 = vmul.f32 %v1482, 0.5
        %v1488 = vmul.f32 %v1482, 0.044715
        %v1489 = vmul.f32 %v1488, %v1482
        %v1490 = vmul.f32 %v1489, %v1482
        %v1491 = vadd.f32 %v1482, %v1490
        %v1492 = vmul.f32 %v1491, 0.7978846
        %v1493 = vtanh.pop %v1492
        %v1494 = vadd.f32 %v1493, 1.0
        %v1495 = vmul.f32 %v1487, %v1494
        %v1496 = vpack.c.bf16 %v1495, %v1495
        %v1497 = vld [vmem:[%s733] sm:$0xf]
        %v1498 = vld [vmem:[%s733 + $0x4] sm:$0xf]
        %v1499 = vld [vmem:[%s733 + $0x8] sm:$0xf]
        %v1500 = vld [vmem:[%s733 + $0xc] sm:$0xf]
        %v1501 = vld [vmem:[%s733 + $0x10] sm:$0xf]
        %v1502 = vld [vmem:[%s733 + $0x14] sm:$0xf]
        %v1503 = vld [vmem:[%s733 + $0x18] sm:$0xf]
        %v1504 = vld [vmem:[%s733 + $0x1c] sm:$0xf]
        %v1505 = vld [vmem:[%s733 + $0x20] sm:$0xf]
        %v1506 = vld [vmem:[%s733 + $0x24] sm:$0xf]
        %v1507 = vld [vmem:[%s733 + $0x28] sm:$0xf]
        %v1508 = vld [vmem:[%s733 + $0x2c] sm:$0xf]
        %v1509 = vld [vmem:[%s733 + $0x30] sm:$0xf]
        %v1510 = vld [vmem:[%s733 + $0x34] sm:$0xf]
        %v1511 = vld [vmem:[%s733 + $0x38] sm:$0xf]
        %v1512 = vld [vmem:[%s733 + $0x3c] sm:$0xf]
        %v1513 = vld [vmem:[%s736] sm:$0x1]
        %v1514 = vunpack.c.l.bf16 %v1513
        %v1515 = vlaneseq
        %v1516 = vshrl.u32 %v1515, 7
        %v1517 = vsub.s32 0, %v1516
        %v1518 = vrot.slane %v1514, %v1517
        %v1535 = vunpack.c.l.b16 %v1497
        %v1536 = vunpack.c.l.b16 %v1498
        %v1537 = vunpack.c.l.b16 %v1499
        %v1538 = vunpack.c.l.b16 %v1500
        %v1539 = vunpack.c.l.b16 %v1501
        %v1540 = vunpack.c.l.b16 %v1502
        %v1541 = vunpack.c.l.b16 %v1503
        %v1542 = vunpack.c.l.b16 %v1504
        %v1543 = vunpack.c.l.b16 %v1505
        %v1544 = vunpack.c.l.b16 %v1506
        %v1545 = vunpack.c.l.b16 %v1507
        %v1546 = vunpack.c.l.b16 %v1508
        %v1547 = vunpack.c.l.b16 %v1509
        %v1548 = vunpack.c.l.b16 %v1510
        %v1549 = vunpack.c.l.b16 %v1511
        %v1550 = vunpack.c.l.b16 %v1512
        %v1551 = vpack.c.b16 %v1536, %v1535
        %v1552 = vpack.c.b16 %v1538, %v1537
        %v1553 = vpack.c.b16 %v1540, %v1539
        %v1554 = vpack.c.b16 %v1542, %v1541
        %v1555 = vpack.c.b16 %v1544, %v1543
        %v1556 = vpack.c.b16 %v1546, %v1545
        %v1557 = vpack.c.b16 %v1548, %v1547
        %v1558 = vpack.c.b16 %v1550, %v1549
        %1567 = vmatprep.subr.bf16.mxu0 0
        %1568 = vmatpush1.bf16.msra.mxu0 %v1551
        %1569 = vmatprep.subr.bf16.mxu0 0
        %1570 = vmatpush1.bf16.msra.mxu0 %v1552
        %1571 = vmatprep.subr.bf16.mxu0 0
        %1572 = vmatpush1.bf16.msra.mxu0 %v1553
        %1573 = vmatprep.subr.bf16.mxu0 0
        %1574 = vmatpush1.bf16.msra.mxu0 %v1554
        %1575 = vmatprep.subr.bf16.mxu0 0
        %1576 = vmatpush1.bf16.msra.mxu0 %v1555
        %1577 = vmatprep.subr.bf16.mxu0 0
        %1578 = vmatpush1.bf16.msra.mxu0 %v1556
        %1579 = vmatprep.subr.bf16.mxu0 0
        %1580 = vmatpush1.bf16.msra.mxu0 %v1557
        %1581 = vmatprep.subr.bf16.mxu0 0
        %1582 = vmatpush1.bf16.msra.mxu0 %v1558
        %1583 = vmatprep.subr.bf16.mxu0 0
        %1584 = vmatpush1.bf16.msra.mxu0 0
        %1585 = vmatprep.subr.bf16.mxu0 0
        %1586 = vmatpush1.bf16.msra.mxu0 0
        %1587 = vmatprep.subr.bf16.mxu0 0
        %1588 = vmatpush1.bf16.msra.mxu0 0
        %1589 = vmatprep.subr.bf16.mxu0 0
        %1590 = vmatpush1.bf16.msra.mxu0 0
        %1591 = vmatprep.subr.bf16.mxu0 0
        %1592 = vmatpush1.bf16.msra.mxu0 0
        %1593 = vmatprep.subr.bf16.mxu0 0
        %1594 = vmatpush1.bf16.msra.mxu0 0
        %1595 = vmatprep.subr.bf16.mxu0 0
        %1596 = vmatpush1.bf16.msra.mxu0 0
        %1597 = vmatprep.subr.bf16.mxu0 0
        %1598 = vmatpush1.bf16.msra.mxu0 0
        %1599 = vmatprep.mubr.bf16.mxu0 0
        %1600 = vmatmul.mubr.bf16.gmra.mrb[0].mxu0 %v1496
        %v1601 = vpop.f32.mrb[0].mxu0
        %v1602 = vadd.f32 %v1518, %v1601
        %v1603 = vpop.f32.mrb[0].mxu0
        %v1604 = vpop.f32.mrb[0].mxu0
        %v1605 = vpop.f32.mrb[0].mxu0
        %1606 = vdwg.mxu0
        %v1607 = vadd.f32 %v1393, %v1602
        %1608 = vst.msk [vmem:[#allocation2] sm:$0xff] %vm751, %v1607
        %1609 = vst.msk [vmem:[%s685] sm:$0xff] %vm751, %v1607
        %s1610 = sand.u32 %s458, 1
        %s1611 = scalar_lea.sflag [#allocation5], %s1610
        %s1612 = sand.u32 %s458, 1
        %s1613 = smul.addr %s1612, 8
        %s1614 = scalar_lea.vmem [#allocation4], %s1613
        // Predicated region
        $region89: #{tpu_custom_call.1} parent=83 // pred_check
          %p1615 = pneg %p468
        $region90: #{tpu_custom_call.1} parent=83 // pred_check_branch
          %1617 = sbr.rel (%p1615) target = $region92
        $region91: #{tpu_custom_call.1} parent=83 // pred_region
          %s1619 = ssub.s32 128, 128
          %1620 = vsyncadd %s1611, %s1619
          %s1621 = smul.addr %s34, 2
          %s1622 = sadd.s32 %s35, %s1621
          %s1623 = smul.addr %s1622, 128
          %s1624 = scalar_lea.hbm %s16, %s1623
          %s1626 = sshll.u32 %s1614, 4
          %s1627 = int_to_ptr.vmem [resolvable:$true] %s1626
          %1629 = dma.vmem_to_hbm [thread:$0]  %s1627, 128, %s1624, %s1611
        $region92: #{tpu_custom_call.1} parent=83 // pred_fallthru
          _
      $region84: #{tpu_custom_call.1} parent=5 // pred_fallthru
        _
      %p1630 = scmp.le.s32.totalorder 2, %s25
      // Predicated region
      $region93: #{tpu_custom_call.1} parent=5 // pred_check
        %p1631 = pneg %p1630
      $region94: #{tpu_custom_call.1} parent=5 // pred_check_branch
        %1633 = sbr.rel (%p1631) target = $region96
      $region95: #{tpu_custom_call.1} parent=5 // pred_region
        %s1634 = ssub.s32 %s25, 2
        // Predicated region
        $region97: #{tpu_custom_call.1} parent=95 // pred_check
          %p1635 = pneg %p474
        $region98: #{tpu_custom_call.1} parent=95 // pred_check_branch
          %1637 = sbr.rel (%p1635) target = $region100
        $region99: #{tpu_custom_call.1} parent=95 // pred_region
          %s1638 = sand.u32 %s459, 1
          %s1639 = scalar_lea.sflag [#allocation5], %s1638
          %s1640 = sand.u32 %s459, 1
          %s1641 = smul.addr %s1640, 8
          %s1642 = scalar_lea.vmem [#allocation4], %s1641
          %1643 = dma.done %s1639, 128
        $region100: #{tpu_custom_call.1} parent=95 // pred_fallthru
          _
      $region96: #{tpu_custom_call.1} parent=5 // pred_fallthru
        _
    $region6: #{tpu_custom_call.1} parent=1 // loop_footer
      %s29 = sadd.s32 1, %s25
    $region7: #{tpu_custom_call.1} parent=1 // loop_footer_branch
      %24 = sbr.rel target = $region3
    $region8: #{tpu_custom_call.1} parent=1 // loop_exit
      _
    %1644 = vsyncpa [#allocation5], 1
    %s1645 = scalar_lea.sflag [#allocation5], 1
    %1646 = vsyncpa %s1645, 1

</llo_original>
